<compile_context>
chip_gen: v6e
topology: v6e:2x2x1
jax: 0.10.0
libtpu: 0.0.40
codegen_flags: <defaults>
</compile_context>

<pallas_src>
import functools

import jax
import jax.numpy as jnp
from jax import lax
from jax.experimental import pallas as pl
from jax.experimental.pallas import tpu as pltpu

KERNEL_SIZE = 4
STRIDE = 1
PADDING = 1
BN_EPS = 1e-5
LEAKY_SLOPE = 0.0          # LeakyReLU(0.0) == ReLU
LANE = 128
SUBLANE = 8


def _round_up(x, m):
    return (x + m - 1) // m * m


def _detect_vmem_limit():
    """Per-generation VMEM budget: ~75% of physical, capped at 96 MiB.

    v7x (64 MiB physical) -> 48 MiB; v5e/v6e (128 MiB) -> 96 MiB.  Falls back
    to the v7x-safe 48 MiB if the query is unavailable.
    """
    phys = 64 * 1024 * 1024
    try:
        info = pltpu.get_tpu_info()
        phys = int(getattr(info, "vmem_capacity_bytes", 0)) or phys
    except Exception:
        pass
    return max(32 * 1024 * 1024, min(96 * 1024 * 1024, (phys * 3) // 4))


_VMEM_LIMIT = _detect_vmem_limit()


def _pick_tiles(m, k, c_pad, vmem_budget):
    """VMEM-budget-driven (tile_m, tile_k).

    Prefer tm >= 512 (~85% of HBM roofline) and shrink the K tile before
    shrinking tm (v7x only has 64 MiB of physical VMEM).
    """
    m_cap = max(LANE, _round_up(m, LANE))
    for tm in (1024, 512, 256, 128):
        if tm > m_cap:
            continue
        for tk in [k] + [t for t in (4096, 2048, 1024, 512, 256, 128) if t < k]:
            need = (2 * tm * tk * 2           # bf16 patch tile, double-buffered
                    + 2 * tk * c_pad * 2      # bf16 weight tile, double-buffered
                    + 2 * tm * c_pad * 2      # bf16 y tile (store path), double-buffered
                    + 2 * tm * c_pad * 4      # f32 output tile, double-buffered (upper bound)
                    + tm * c_pad * 4          # f32 accumulator scratch
                    + 4 * SUBLANE * c_pad * 4)  # per-tile stats blocks
            if need <= vmem_budget:
                return tm, tk
    return 128, 128


def _conv_stats_kernel(p_ref, w_ref, sum_ref, sq_ref, acc_ref):
    """Pass 1 (recompute variant): K-tiled conv matmul; per-M-tile channel stats."""
    kk = pl.program_id(1)

    @pl.when(kk == 0)
    def _():
        acc_ref[...] = jnp.zeros_like(acc_ref)

    acc_ref[...] += jnp.dot(p_ref[...], w_ref[...],
                            preferred_element_type=jnp.float32)

    @pl.when(kk == pl.num_programs(1) - 1)
    def _():
        y = acc_ref[...]
        s = jnp.sum(y, axis=0, keepdims=True)
        q = jnp.sum(y * y, axis=0, keepdims=True)
        sum_ref[...] = jnp.broadcast_to(s, sum_ref.shape)
        sq_ref[...] = jnp.broadcast_to(q, sq_ref.shape)


def _conv_stats_store_kernel(p_ref, w_ref, y_ref, sum_ref, sq_ref, acc_ref):
    """Pass 1 (store variant): also persists the conv output as bf16 for pass 2."""
    kk = pl.program_id(1)

    @pl.when(kk == 0)
    def _():
        acc_ref[...] = jnp.zeros_like(acc_ref)

    acc_ref[...] += jnp.dot(p_ref[...], w_ref[...],
                            preferred_element_type=jnp.float32)

    @pl.when(kk == pl.num_programs(1) - 1)
    def _():
        y = acc_ref[...]
        y_ref[...] = y.astype(y_ref.dtype)
        s = jnp.sum(y, axis=0, keepdims=True)
        q = jnp.sum(y * y, axis=0, keepdims=True)
        sum_ref[...] = jnp.broadcast_to(s, sum_ref.shape)
        sq_ref[...] = jnp.broadcast_to(q, sq_ref.shape)


def _relu(z, slope):
    if slope == 0.0:
        return jnp.maximum(z, 0.0)
    return jnp.where(z > 0, z, slope * z)


def _make_apply_recompute_kernel(slope):
    """Pass 2 (recompute variant): redo the matmul, fold BN affine + (Leaky)ReLU."""
    def kernel(p_ref, w_ref, scale_ref, shift_ref, o_ref, acc_ref):
        kk = pl.program_id(1)

        @pl.when(kk == 0)
        def _():
            acc_ref[...] = jnp.zeros_like(acc_ref)

        acc_ref[...] += jnp.dot(p_ref[...], w_ref[...],
                                preferred_element_type=jnp.float32)

        @pl.when(kk == pl.num_programs(1) - 1)
        def _():
            z = _relu(acc_ref[...] * scale_ref[...] + shift_ref[...], slope)
            # Drop the MXU lane padding -> 16x fewer HBM output bytes at c_out=8.
            o_ref[...] = z[:, :o_ref.shape[1]]
    return kernel


def _make_apply_affine_kernel(slope):
    """Pass 2 (store variant): pure elementwise BN affine + (Leaky)ReLU over bf16 y."""
    def kernel(y_ref, scale_ref, shift_ref, o_ref):
        z = _relu(y_ref[...].astype(jnp.float32) * scale_ref[...] + shift_ref[...],
                  slope)
        o_ref[...] = z[:, :o_ref.shape[1]]
    return kernel


@functools.partial(jax.jit, static_argnames=(
    "kernel_size", "stride", "padding", "leaky_slope", "tile_m", "tile_k"))
def ck_forward(x, conv_w, conv_b, bn_gamma, bn_beta, *,
               kernel_size=KERNEL_SIZE, stride=STRIDE, padding=PADDING,
               leaky_slope=LEAKY_SLOPE, tile_m=None, tile_k=None):
    """x: (N, C_in, H, W) f32 NCHW.  conv_w: (C_out, C_in, kh, kw).  Returns NCHW f32."""
    n, c_in, h, w = x.shape
    c_out = conv_w.shape[0]
    del conv_b  # BN mean subtraction cancels the conv bias exactly -> skip the DMA + add.

    # --- im2col: transpose x to NHWC (1x data), then lane-axis concat of the 16
    #     shifted views in (kh, kw, C_in) order.  bf16 halves the patch HBM bytes;
    #     the MXU accumulates in f32. ---
    ho = (h + 2 * padding - kernel_size) // stride + 1
    wo = (w + 2 * padding - kernel_size) // stride + 1
    x_nhwc = x.astype(jnp.bfloat16).transpose(0, 2, 3, 1)
    xp = jnp.pad(x_nhwc, ((0, 0), (padding, padding), (padding, padding), (0, 0)))
    cols = [xp[:, kh:kh + stride * ho:stride, kw:kw + stride * wo:stride, :]
            for kh in range(kernel_size) for kw in range(kernel_size)]
    patches = jnp.concatenate(cols, axis=-1)               # (N, Ho, Wo, kh*kw*C_in)
    m = n * ho * wo
    k = kernel_size * kernel_size * c_in
    patches = patches.reshape(m, k)

    c_pad = _round_up(c_out, LANE)     # lane padding for the MXU operand only
    if tile_m is None or tile_k is None:
        auto_tm, auto_tk = _pick_tiles(m, k, c_pad, _VMEM_LIMIT)
        tm = auto_tm if tile_m is None else tile_m
        tk = auto_tk if tile_k is None else tile_k
    else:
        tm, tk = tile_m, tile_k

    m_pad = _round_up(m, tm)
    k_pad = _round_up(k, tk)
    n_mt = m_pad // tm
    n_kt = k_pad // tk

    patches = jnp.pad(patches, ((0, m_pad - m), (0, k_pad - k)))   # zero pads: no effect
    w_mat = conv_w.transpose(2, 3, 1, 0).reshape(k, c_out).astype(jnp.bfloat16)
    w_mat = jnp.pad(w_mat, ((0, k_pad - k), (0, c_pad - c_out)))   # (K_pad, C_pad)

    grid = (n_mt, n_kt)
    p_spec = pl.BlockSpec((tm, tk), lambda i, kk: (i, kk))
    w_spec = pl.BlockSpec((tk, c_pad), lambda i, kk: (kk, 0))
    stats_spec = pl.BlockSpec((SUBLANE, c_pad), lambda i, kk: (i, 0))
    stats_shape = jax.ShapeDtypeStruct((n_mt * SUBLANE, c_pad), jnp.float32)
    acc_scratch = pltpu.VMEM((tm, c_pad), jnp.float32)
    cparams = pltpu.CompilerParams(
        dimension_semantics=("parallel", "arbitrary"),   # M across cores, K reduce innermost
        vmem_limit_bytes=_VMEM_LIMIT)

    # Re-reading the bf16 patches (2*M*K bytes) in pass 2 costs more HBM traffic
    # than storing the bf16 conv output (2*M*C_pad bytes) whenever K > 2*C_pad
    # (true for most real ck layers).
    store_y = k_pad > 2 * c_pad

    # ---- Pass 1: conv matmul; per-M-tile partial channel sum / sum-of-squares ----
    if store_y:
        y_bf16, sum_parts, sq_parts = pl.pallas_call(
            _conv_stats_store_kernel,
            out_shape=(jax.ShapeDtypeStruct((m_pad, c_pad), jnp.bfloat16),
                       stats_shape, stats_shape),
            grid=grid,
            in_specs=[p_spec, w_spec],
            out_specs=(pl.BlockSpec((tm, c_pad), lambda i, kk: (i, 0)),
                       stats_spec, stats_spec),
            scratch_shapes=[acc_scratch],
            compiler_params=cparams,
        )(patches, w_mat)
    else:
        y_bf16 = None
        sum_parts, sq_parts = pl.pallas_call(
            _conv_stats_kernel,
            out_shape=(stats_shape, stats_shape),
            grid=grid,
            in_specs=[p_spec, w_spec],
            out_specs=(stats_spec, stats_spec),
            scratch_shapes=[acc_scratch],
            compiler_params=cparams,
        )(patches, w_mat)

    # ---- Fold BN (training-mode batch stats, biased variance) into scale/shift ----
    # Per-M-tile partials are reduced pairwise here (better conditioned than one
    # long serial running sum, and keeps the M grid axis "parallel" on v7x).
    ch_sum = sum_parts[::SUBLANE].sum(axis=0, keepdims=True)       # (1, C_pad)
    ch_sq = sq_parts[::SUBLANE].sum(axis=0, keepdims=True)
    inv_m = 1.0 / m                                  # true row count (padded rows are zero)
    mean = ch_sum * inv_m
    var = jnp.maximum(ch_sq * inv_m - mean * mean, 0.0)
    inv_std = lax.rsqrt(var + BN_EPS)
    gamma = jnp.pad(bn_gamma.astype(jnp.float32), (0, c_pad - c_out)).reshape(1, c_pad)
    beta = jnp.pad(bn_beta.astype(jnp.float32), (0, c_pad - c_out)).reshape(1, c_pad)
    scale = gamma * inv_std
    shift = beta - mean * scale

    # ---- Pass 2: BN affine + (Leaky)ReLU; HBM output is (M, C_out), no lane padding ----
    out_shape = jax.ShapeDtypeStruct((m_pad, c_out), jnp.float32)
    if store_y:
        out_flat = pl.pallas_call(
            _make_apply_affine_kernel(leaky_slope),
            out_shape=out_shape,
            grid=(n_mt,),
            in_specs=[pl.BlockSpec((tm, c_pad), lambda i: (i, 0)),
                      pl.BlockSpec((1, c_pad), lambda i: (0, 0)),
                      pl.BlockSpec((1, c_pad), lambda i: (0, 0))],
            out_specs=pl.BlockSpec((tm, c_out), lambda i: (i, 0)),
            compiler_params=pltpu.CompilerParams(
                dimension_semantics=("parallel",),
                vmem_limit_bytes=_VMEM_LIMIT),
        )(y_bf16, scale, shift)
    else:
        out_flat = pl.pallas_call(
            _make_apply_recompute_kernel(leaky_slope),
            out_shape=out_shape,
            grid=grid,
            in_specs=[p_spec, w_spec,
                      pl.BlockSpec((1, c_pad), lambda i, kk: (0, 0)),
                      pl.BlockSpec((1, c_pad), lambda i, kk: (0, 0))],
            out_specs=pl.BlockSpec((tm, c_out), lambda i, kk: (i, 0)),
            scratch_shapes=[acc_scratch],
            compiler_params=cparams,
        )(patches, w_mat, scale, shift)

    # (M, C_out) is flattened NHWC; the module contract is NCHW, so convert here.
    out = out_flat[:m].reshape(n, ho, wo, c_out).transpose(0, 3, 1, 2)
    return out


def _reference(x, w, b, gamma, beta, slope):
    """Pure-JAX f32 reference: Conv2d(+bias) -> BatchNorm(train, biased var) -> LeakyReLU."""
    y = lax.conv_general_dilated(
        x, w, window_strides=(STRIDE, STRIDE),
        padding=((PADDING, PADDING), (PADDING, PADDING)),
        dimension_numbers=("NCHW", "OIHW", "NCHW"))
    y = y + b[None, :, None, None]
    mean = jnp.mean(y, axis=(0, 2, 3), keepdims=True)
    var = jnp.var(y, axis=(0, 2, 3), keepdims=True)
    z = (y - mean) * lax.rsqrt(var + BN_EPS)
    z = z * gamma[None, :, None, None] + beta[None, :, None, None]
    return jnp.where(z > 0, z, slope * z)


if __name__ == "__main__":
    key = jax.random.PRNGKey(0)

    # ---- Test 1: module defaults (batch=2, in_ch=4, out_ch=8, 16x16 spatial).
    #      K=64 < 2*C_pad -> matmul-recompute path, auto tiles. ----
    N, C_IN, C_OUT, H, W = 2, 4, 8, 16, 16
    k1, k2, k3, key = jax.random.split(key, 4)
    x = jax.random.normal(k1, (N, C_IN, H, W), dtype=jnp.float32)
    fan_in = C_IN * KERNEL_SIZE * KERNEL_SIZE
    bound = 1.0 / fan_in ** 0.5
    conv_w = jax.random.uniform(k2, (C_OUT, C_IN, KERNEL_SIZE, KERNEL_SIZE),
                                minval=-bound, maxval=bound, dtype=jnp.float32)
    conv_b = jax.random.uniform(k3, (C_OUT,), minval=-bound, maxval=bound,
                                dtype=jnp.float32)
    bn_gamma = jnp.ones((C_OUT,), jnp.float32)
    bn_beta = jnp.zeros((C_OUT,), jnp.float32)

    out = ck_forward(x, conv_w, conv_b, bn_gamma, bn_beta)
    jax.block_until_ready(out)
    ho = (H + 2 * PADDING - KERNEL_SIZE) // STRIDE + 1
    wo = (W + 2 * PADDING - KERNEL_SIZE) // STRIDE + 1
    assert out.shape == (N, C_OUT, ho, wo)
    assert bool(jnp.all(jnp.isfinite(out)))
    ref = _reference(x, conv_w, conv_b, bn_gamma, bn_beta, LEAKY_SLOPE)
    err1 = float(jnp.max(jnp.abs(out - ref)))
    assert err1 < 1e-1, f"test1 max abs err {err1}"

    # ---- Test 2: wider C_in (K=512 > 2*C_pad) with forced small tiles.
    #      Exercises the bf16-y store path, the K-grid accumulator and the
    #      multi-M-tile partial stats reduction. ----
    C_IN2, C_OUT2 = 32, 8
    k1, k2, k3, k4 = jax.random.split(key, 4)
    x2 = jax.random.normal(k1, (N, C_IN2, H, W), dtype=jnp.float32)
    fan_in2 = C_IN2 * KERNEL_SIZE * KERNEL_SIZE
    bound2 = 1.0 / fan_in2 ** 0.5
    conv_w2 = jax.random.uniform(k2, (C_OUT2, C_IN2, KERNEL_SIZE, KERNEL_SIZE),
                                 minval=-bound2, maxval=bound2, dtype=jnp.float32)
    conv_b2 = jax.random.uniform(k3, (C_OUT2,), minval=-bound2, maxval=bound2,
                                 dtype=jnp.float32)
    bn_gamma2 = 1.0 + 0.1 * jax.random.normal(k4, (C_OUT2,), dtype=jnp.float32)
    bn_beta2 = jnp.full((C_OUT2,), 0.05, jnp.float32)

    out2 = ck_forward(x2, conv_w2, conv_b2, bn_gamma2, bn_beta2,
                      tile_m=256, tile_k=256)
    jax.block_until_ready(out2)
    assert out2.shape == (N, C_OUT2, ho, wo)
    assert bool(jnp.all(jnp.isfinite(out2)))
    ref2 = _reference(x2, conv_w2, conv_b2, bn_gamma2, bn_beta2, LEAKY_SLOPE)
    err2 = float(jnp.max(jnp.abs(out2 - ref2)))
    assert err2 < 1e-1, f"test2 max abs err {err2}"

    print("KERNEL_OK")
</pallas_src>

<mosaic_0001>
module attributes {stable_mosaic.version = 11 : i64} {
  func.func @_conv_stats_kernel(%arg0: i32, %arg1: i32, %arg2: memref<512x64xbf16, #tpu.memory_space<vmem>>, %arg3: memref<64x128xbf16, #tpu.memory_space<vmem>>, %arg4: memref<8x128xf32, #tpu.memory_space<vmem>>, %arg5: memref<8x128xf32, #tpu.memory_space<vmem>>, %arg6: memref<512x128xf32, #tpu.memory_space<vmem>>) attributes {dimension_semantics = [#tpu.dimension_semantics<parallel>, #tpu.dimension_semantics<arbitrary>], iteration_bounds = array<i64: 1, 1>, scalar_prefetch = 0 : i64, scratch_operands = 1 : i64, tpu.core_type = #tpu.core_type<tc>, window_params = [{transform_indices = @transform_0, window_bounds = array<i64: 512, 64>}, {transform_indices = @transform_1, window_bounds = array<i64: 64, 128>}, {transform_indices = @transform_2, window_bounds = array<i64: 8, 128>}, {transform_indices = @transform_3, window_bounds = array<i64: 8, 128>}]} {
    %c0_i32 = arith.constant 0 : i32
    %0 = arith.cmpi eq, %arg1, %c0_i32 : i32
    %1 = arith.extui %0 : i1 to i32
    %c0_i32_0 = arith.constant 0 : i32
    %2 = arith.cmpi ne, %1, %c0_i32_0 : i32
    scf.if %2 {
      %cst_10 = arith.constant 0.000000e+00 : f32
      %12 = vector.broadcast %cst_10 : f32 to vector<512x128xf32>
      %c0_11 = arith.constant 0 : index
      %c0_12 = arith.constant 0 : index
      %13 = vector.load %arg6[%c0_11, %c0_12] : memref<512x128xf32, #tpu.memory_space<vmem>>, vector<512x128xf32>
      tpu.vector_store %arg6[%c0_11, %c0_12], %12 {strides = array<i32>} : memref<512x128xf32, #tpu.memory_space<vmem>>, vector<512x128xf32>,
    } else {
    }
    %c0 = arith.constant 0 : index
    %c0_1 = arith.constant 0 : index
    %3 = vector.load %arg6[%c0, %c0_1] : memref<512x128xf32, #tpu.memory_space<vmem>>, vector<512x128xf32>
    %c0_2 = arith.constant 0 : index
    %c0_3 = arith.constant 0 : index
    %4 = vector.load %arg2[%c0_2, %c0_3] : memref<512x64xbf16, #tpu.memory_space<vmem>>, vector<512x64xbf16>
    %c0_4 = arith.constant 0 : index
    %c0_5 = arith.constant 0 : index
    %5 = vector.load %arg3[%c0_4, %c0_5] : memref<64x128xbf16, #tpu.memory_space<vmem>>, vector<64x128xbf16>
    %cst = arith.constant dense<0.000000e+00> : vector<512x128xf32>
    %6 = tpu.matmul %4, %5, %cst {dimension_numbers = #tpu.dot_dimension_numbers<[1], [0], [0], [1], [0, 0, 1, 1], [], []>} : vector<512x64xbf16>, vector<64x128xbf16>, vector<512x128xf32> -> vector<512x128xf32>
    %7 = arith.addf %3, %6 : vector<512x128xf32>
    %c0_6 = arith.constant 0 : index
    %c0_7 = arith.constant 0 : index
    %8 = vector.load %arg6[%c0_6, %c0_7] : memref<512x128xf32, #tpu.memory_space<vmem>>, vector<512x128xf32>
    tpu.vector_store %arg6[%c0_6, %c0_7], %7 {strides = array<i32>} : memref<512x128xf32, #tpu.memory_space<vmem>>, vector<512x128xf32>,
    %c0_i32_8 = arith.constant 0 : i32
    %9 = arith.cmpi eq, %arg1, %c0_i32_8 : i32
    %10 = arith.extui %9 : i1 to i32
    %c0_i32_9 = arith.constant 0 : i32
    %11 = arith.cmpi ne, %10, %c0_i32_9 : i32
    scf.if %11 {
      %c0_10 = arith.constant 0 : index
      %c0_11 = arith.constant 0 : index
      %12 = vector.load %arg6[%c0_10, %c0_11] : memref<512x128xf32, #tpu.memory_space<vmem>>, vector<512x128xf32>
      %cst_12 = arith.constant dense<0.000000e+00> : vector<128xf32>
      %13 = vector.multi_reduction <add>, %12, %cst_12 [0] : vector<512x128xf32> to vector<128xf32>
      %14 = vector.shape_cast %13 : vector<128xf32> to vector<1x128xf32>
      %15 = arith.mulf %12, %12 : vector<512x128xf32>
      %cst_13 = arith.constant dense<0.000000e+00> : vector<128xf32>
      %16 = vector.multi_reduction <add>, %15, %cst_13 [0] : vector<512x128xf32> to vector<128xf32>
      %17 = vector.shape_cast %16 : vector<128xf32> to vector<1x128xf32>
      %18 = vector.shape_cast %14 : vector<1x128xf32> to vector<1x128xf32>
      %19 = vector.broadcast %18 : vector<1x128xf32> to vector<8x128xf32>
      %c0_14 = arith.constant 0 : index
      %c0_15 = arith.constant 0 : index
      %20 = vector.load %arg4[%c0_14, %c0_15] : memref<8x128xf32, #tpu.memory_space<vmem>>, vector<8x128xf32>
      tpu.vector_store %arg4[%c0_14, %c0_15], %19 {strides = array<i32>} : memref<8x128xf32, #tpu.memory_space<vmem>>, vector<8x128xf32>,
      %21 = vector.shape_cast %17 : vector<1x128xf32> to vector<1x128xf32>
      %22 = vector.broadcast %21 : vector<1x128xf32> to vector<8x128xf32>
      %c0_16 = arith.constant 0 : index
      %c0_17 = arith.constant 0 : index
      %23 = vector.load %arg5[%c0_16, %c0_17] : memref<8x128xf32, #tpu.memory_space<vmem>>, vector<8x128xf32>
      tpu.vector_store %arg5[%c0_16, %c0_17], %22 {strides = array<i32>} : memref<8x128xf32, #tpu.memory_space<vmem>>, vector<8x128xf32>,
    } else {
    }
    return
  }
  func.func @transform_0(%arg0: i32, %arg1: i32) -> (i32, i32) {
    %c0_i32 = arith.constant 0 : i32
    return %arg0, %arg1 : i32, i32
  }
  func.func @transform_1(%arg0: i32, %arg1: i32) -> (i32, i32) {
    %c0_i32 = arith.constant 0 : i32
    %c0_i32_0 = arith.constant 0 : i32
    return %arg1, %c0_i32 : i32, i32
  }
  func.func @transform_2(%arg0: i32, %arg1: i32) -> (i32, i32) {
    %c0_i32 = arith.constant 0 : i32
    %c0_i32_0 = arith.constant 0 : i32
    return %arg0, %c0_i32 : i32, i32
  }
  func.func @transform_3(%arg0: i32, %arg1: i32) -> (i32, i32) {
    %c0_i32 = arith.constant 0 : i32
    %c0_i32_0 = arith.constant 0 : i32
    return %arg0, %c0_i32 : i32, i32
  }
}

module attributes {stable_mosaic.version = 11 : i64} {
  func.func @kernel(%arg0: i32, %arg1: i32, %arg2: memref<512x64xbf16, #tpu.memory_space<vmem>>, %arg3: memref<64x128xbf16, #tpu.memory_space<vmem>>, %arg4: memref<1x128xf32, #tpu.memory_space<vmem>>, %arg5: memref<1x128xf32, #tpu.memory_space<vmem>>, %arg6: memref<512x8xf32, #tpu.memory_space<vmem>>, %arg7: memref<512x128xf32, #tpu.memory_space<vmem>>) attributes {dimension_semantics = [#tpu.dimension_semantics<parallel>, #tpu.dimension_semantics<arbitrary>], iteration_bounds = array<i64: 1, 1>, scalar_prefetch = 0 : i64, scratch_operands = 1 : i64, tpu.core_type = #tpu.core_type<tc>, window_params = [{transform_indices = @transform_0, window_bounds = array<i64: 512, 64>}, {transform_indices = @transform_1, window_bounds = array<i64: 64, 128>}, {pipeline_mode = #tpu.pipeline_mode<synchronous>, transform_indices = @transform_2, window_bounds = array<i64: 1, 128>}, {pipeline_mode = #tpu.pipeline_mode<synchronous>, transform_indices = @transform_3, window_bounds = array<i64: 1, 128>}, {transform_indices = @transform_4, window_bounds = array<i64: 512, 8>}]} {
    %c0_i32 = arith.constant 0 : i32
    %0 = arith.cmpi eq, %arg1, %c0_i32 : i32
    %1 = arith.extui %0 : i1 to i32
    %c0_i32_0 = arith.constant 0 : i32
    %2 = arith.cmpi ne, %1, %c0_i32_0 : i32
    scf.if %2 {
      %cst_10 = arith.constant 0.000000e+00 : f32
      %12 = vector.broadcast %cst_10 : f32 to vector<512x128xf32>
      %c0_11 = arith.constant 0 : index
      %c0_12 = arith.constant 0 : index
      %13 = vector.load %arg7[%c0_11, %c0_12] : memref<512x128xf32, #tpu.memory_space<vmem>>, vector<512x128xf32>
      tpu.vector_store %arg7[%c0_11, %c0_12], %12 {strides = array<i32>} : memref<512x128xf32, #tpu.memory_space<vmem>>, vector<512x128xf32>,
    } else {
    }
    %c0 = arith.constant 0 : index
    %c0_1 = arith.constant 0 : index
    %3 = vector.load %arg7[%c0, %c0_1] : memref<512x128xf32, #tpu.memory_space<vmem>>, vector<512x128xf32>
    %c0_2 = arith.constant 0 : index
    %c0_3 = arith.constant 0 : index
    %4 = vector.load %arg2[%c0_2, %c0_3] : memref<512x64xbf16, #tpu.memory_space<vmem>>, vector<512x64xbf16>
    %c0_4 = arith.constant 0 : index
    %c0_5 = arith.constant 0 : index
    %5 = vector.load %arg3[%c0_4, %c0_5] : memref<64x128xbf16, #tpu.memory_space<vmem>>, vector<64x128xbf16>
    %cst = arith.constant dense<0.000000e+00> : vector<512x128xf32>
    %6 = tpu.matmul %4, %5, %cst {dimension_numbers = #tpu.dot_dimension_numbers<[1], [0], [0], [1], [0, 0, 1, 1], [], []>} : vector<512x64xbf16>, vector<64x128xbf16>, vector<512x128xf32> -> vector<512x128xf32>
    %7 = arith.addf %3, %6 : vector<512x128xf32>
    %c0_6 = arith.constant 0 : index
    %c0_7 = arith.constant 0 : index
    %8 = vector.load %arg7[%c0_6, %c0_7] : memref<512x128xf32, #tpu.memory_space<vmem>>, vector<512x128xf32>
    tpu.vector_store %arg7[%c0_6, %c0_7], %7 {strides = array<i32>} : memref<512x128xf32, #tpu.memory_space<vmem>>, vector<512x128xf32>,
    %c0_i32_8 = arith.constant 0 : i32
    %9 = arith.cmpi eq, %arg1, %c0_i32_8 : i32
    %10 = arith.extui %9 : i1 to i32
    %c0_i32_9 = arith.constant 0 : i32
    %11 = arith.cmpi ne, %10, %c0_i32_9 : i32
    scf.if %11 {
      %c0_10 = arith.constant 0 : index
      %c0_11 = arith.constant 0 : index
      %12 = vector.load %arg7[%c0_10, %c0_11] : memref<512x128xf32, #tpu.memory_space<vmem>>, vector<512x128xf32>
      %c0_12 = arith.constant 0 : index
      %c0_13 = arith.constant 0 : index
      %13 = vector.load %arg4[%c0_12, %c0_13] : memref<1x128xf32, #tpu.memory_space<vmem>>, vector<1x128xf32>
      %14 = vector.broadcast %13 : vector<1x128xf32> to vector<512x128xf32>
      %15 = arith.mulf %12, %14 : vector<512x128xf32>
      %c0_14 = arith.constant 0 : index
      %c0_15 = arith.constant 0 : index
      %16 = vector.load %arg5[%c0_14, %c0_15] : memref<1x128xf32, #tpu.memory_space<vmem>>, vector<1x128xf32>
      %17 = vector.broadcast %16 : vector<1x128xf32> to vector<512x128xf32>
      %18 = arith.addf %15, %17 : vector<512x128xf32>
      %cst_16 = arith.constant 0.000000e+00 : f32
      %19 = vector.broadcast %cst_16 : f32 to vector<512x128xf32>
      %20 = arith.maximumf %18, %19 : vector<512x128xf32>
      %21 = vector.extract_strided_slice %20 {offsets = [0, 0], sizes = [512, 8], strides = [1, 1]} : vector<512x128xf32> to vector<512x8xf32>
      %c0_17 = arith.constant 0 : index
      %c0_18 = arith.constant 0 : index
      %22 = vector.load %arg6[%c0_17, %c0_18] : memref<512x8xf32, #tpu.memory_space<vmem>>, vector<512x8xf32>
      tpu.vector_store %arg6[%c0_17, %c0_18], %21 {strides = array<i32>} : memref<512x8xf32, #tpu.memory_space<vmem>>, vector<512x8xf32>,
    } else {
    }
    return
  }
  func.func @transform_0(%arg0: i32, %arg1: i32) -> (i32, i32) {
    %c0_i32 = arith.constant 0 : i32
    return %arg0, %arg1 : i32, i32
  }
  func.func @transform_1(%arg0: i32, %arg1: i32) -> (i32, i32) {
    %c0_i32 = arith.constant 0 : i32
    %c0_i32_0 = arith.constant 0 : i32
    return %arg1, %c0_i32 : i32, i32
  }
  func.func @transform_2(%arg0: i32, %arg1: i32) -> (i32, i32) {
    %c0_i32 = arith.constant 0 : i32
    %c0_i32_0 = arith.constant 0 : i32
    %c0_i32_1 = arith.constant 0 : i32
    return %c0_i32, %c0_i32_0 : i32, i32
  }
  func.func @transform_3(%arg0: i32, %arg1: i32) -> (i32, i32) {
    %c0_i32 = arith.constant 0 : i32
    %c0_i32_0 = arith.constant 0 : i32
    %c0_i32_1 = arith.constant 0 : i32
    return %c0_i32, %c0_i32_0 : i32, i32
  }
  func.func @transform_4(%arg0: i32, %arg1: i32) -> (i32, i32) {
    %c0_i32 = arith.constant 0 : i32
    %c0_i32_0 = arith.constant 0 : i32
    return %arg0, %c0_i32 : i32, i32
  }
}

</mosaic_0001>

<llo_original>
// kernel: ck_forward.2
$region0: #{ck_forward.2}
  #allocation0 [shape = 'u32[]', space=smem, size = 0x4, offset = 0x4, fixed_abs, tag = 'smem constant byte address 0x4 - core index']
  #allocation1 [shape = 'u32[144,128]{1,0:T(1,128)}', space=vmem, size = 0x12000, scoped, tag = 'internal scratch']
  #allocation2 [shape = 'f32[512,128]{1,0:T(8,128)}', space=vmem, size = 0x40000, scoped, tag = 'scratch operand']
  %s0 = inlined_call_operand.vmem [shape: bf16[512,64], index: 0, kind: input, shape index: {}]
  %s1 = inlined_call_operand.vmem [shape: bf16[64,128], index: 1, kind: input, shape index: {}]
  %s2 = inlined_call_operand.vmem [shape: f32[8,128], index: 2, kind: output, shape index: {0}]
  %s3 = inlined_call_operand.vmem [shape: f32[8,128], index: 3, kind: output, shape index: {1}]
  %4 = xla_tuple %s2, %s3
  %s5 = sld [smem:[#allocation0]]
  $region34: #{ck_forward.2} parent=0
    _
  %s7 = ssub.s32 1, %s5
  %s8 = scalar_select 0, %s7, %s5
  // Predicated region
  $region2: #{ck_forward.2} parent=0 // pred_check
    _
  $region3: #{ck_forward.2} parent=0 // pred_check_branch
    %10 = sbr.rel (0) target = $region5
  $region4: #{ck_forward.2} parent=0 // pred_region
    _
  $region5: #{ck_forward.2} parent=0 // pred_fallthru
    _
  // Predicated region
  $region6: #{ck_forward.2} parent=0 // pred_check
    _
  $region7: #{ck_forward.2} parent=0 // pred_check_branch
    %12 = sbr.rel (0) target = $region9
  $region8: #{ck_forward.2} parent=0 // pred_region
    _
  $region9: #{ck_forward.2} parent=0 // pred_fallthru
    _
  %p14 = scmp.eq.s32.totalorder 0, 0
  // Predicated region
  $region10: #{ck_forward.2} parent=0 // pred_check
    %p15 = pneg %p14
  $region11: #{ck_forward.2} parent=0 // pred_check_branch
    %17 = sbr.rel (%p15) target = $region13
  $region12: #{ck_forward.2} parent=0 // pred_region
    %18 = vst [vmem:[#allocation2] sm:$0xff] 0.0
    %19 = vst [vmem:[#allocation2 + $0x8] sm:$0xff] 0.0
    %20 = vst [vmem:[#allocation2 + $0x10] sm:$0xff] 0.0
    %21 = vst [vmem:[#allocation2 + $0x18] sm:$0xff] 0.0
    %22 = vst [vmem:[#allocation2 + $0x20] sm:$0xff] 0.0
    %23 = vst [vmem:[#allocation2 + $0x28] sm:$0xff] 0.0
    %24 = vst [vmem:[#allocation2 + $0x30] sm:$0xff] 0.0
    %25 = vst [vmem:[#allocation2 + $0x38] sm:$0xff] 0.0
    %26 = vst [vmem:[#allocation2 + $0x40] sm:$0xff] 0.0
    %27 = vst [vmem:[#allocation2 + $0x48] sm:$0xff] 0.0
    %28 = vst [vmem:[#allocation2 + $0x50] sm:$0xff] 0.0
    %29 = vst [vmem:[#allocation2 + $0x58] sm:$0xff] 0.0
    %30 = vst [vmem:[#allocation2 + $0x60] sm:$0xff] 0.0
    %31 = vst [vmem:[#allocation2 + $0x68] sm:$0xff] 0.0
    %32 = vst [vmem:[#allocation2 + $0x70] sm:$0xff] 0.0
    %33 = vst [vmem:[#allocation2 + $0x78] sm:$0xff] 0.0
    %34 = vst [vmem:[#allocation2 + $0x80] sm:$0xff] 0.0
    %35 = vst [vmem:[#allocation2 + $0x88] sm:$0xff] 0.0
    %36 = vst [vmem:[#allocation2 + $0x90] sm:$0xff] 0.0
    %37 = vst [vmem:[#allocation2 + $0x98] sm:$0xff] 0.0
    %38 = vst [vmem:[#allocation2 + $0xa0] sm:$0xff] 0.0
    %39 = vst [vmem:[#allocation2 + $0xa8] sm:$0xff] 0.0
    %40 = vst [vmem:[#allocation2 + $0xb0] sm:$0xff] 0.0
    %41 = vst [vmem:[#allocation2 + $0xb8] sm:$0xff] 0.0
    %42 = vst [vmem:[#allocation2 + $0xc0] sm:$0xff] 0.0
    %43 = vst [vmem:[#allocation2 + $0xc8] sm:$0xff] 0.0
    %44 = vst [vmem:[#allocation2 + $0xd0] sm:$0xff] 0.0
    %45 = vst [vmem:[#allocation2 + $0xd8] sm:$0xff] 0.0
    %46 = vst [vmem:[#allocation2 + $0xe0] sm:$0xff] 0.0
    %47 = vst [vmem:[#allocation2 + $0xe8] sm:$0xff] 0.0
    %48 = vst [vmem:[#allocation2 + $0xf0] sm:$0xff] 0.0
    %49 = vst [vmem:[#allocation2 + $0xf8] sm:$0xff] 0.0
    %50 = vst [vmem:[#allocation2 + $0x100] sm:$0xff] 0.0
    %51 = vst [vmem:[#allocation2 + $0x108] sm:$0xff] 0.0
    %52 = vst [vmem:[#allocation2 + $0x110] sm:$0xff] 0.0
    %53 = vst [vmem:[#allocation2 + $0x118] sm:$0xff] 0.0
    %54 = vst [vmem:[#allocation2 + $0x120] sm:$0xff] 0.0
    %55 = vst [vmem:[#allocation2 + $0x128] sm:$0xff] 0.0
    %56 = vst [vmem:[#allocation2 + $0x130] sm:$0xff] 0.0
    %57 = vst [vmem:[#allocation2 + $0x138] sm:$0xff] 0.0
    %58 = vst [vmem:[#allocation2 + $0x140] sm:$0xff] 0.0
    %59 = vst [vmem:[#allocation2 + $0x148] sm:$0xff] 0.0
    %60 = vst [vmem:[#allocation2 + $0x150] sm:$0xff] 0.0
    %61 = vst [vmem:[#allocation2 + $0x158] sm:$0xff] 0.0
    %62 = vst [vmem:[#allocation2 + $0x160] sm:$0xff] 0.0
    %63 = vst [vmem:[#allocation2 + $0x168] sm:$0xff] 0.0
    %64 = vst [vmem:[#allocation2 + $0x170] sm:$0xff] 0.0
    %65 = vst [vmem:[#allocation2 + $0x178] sm:$0xff] 0.0
    %66 = vst [vmem:[#allocation2 + $0x180] sm:$0xff] 0.0
    %67 = vst [vmem:[#allocation2 + $0x188] sm:$0xff] 0.0
    %68 = vst [vmem:[#allocation2 + $0x190] sm:$0xff] 0.0
    %69 = vst [vmem:[#allocation2 + $0x198] sm:$0xff] 0.0
    %70 = vst [vmem:[#allocation2 + $0x1a0] sm:$0xff] 0.0
    %71 = vst [vmem:[#allocation2 + $0x1a8] sm:$0xff] 0.0
    %72 = vst [vmem:[#allocation2 + $0x1b0] sm:$0xff] 0.0
    %73 = vst [vmem:[#allocation2 + $0x1b8] sm:$0xff] 0.0
    %74 = vst [vmem:[#allocation2 + $0x1c0] sm:$0xff] 0.0
    %75 = vst [vmem:[#allocation2 + $0x1c8] sm:$0xff] 0.0
    %76 = vst [vmem:[#allocation2 + $0x1d0] sm:$0xff] 0.0
    %77 = vst [vmem:[#allocation2 + $0x1d8] sm:$0xff] 0.0
    %78 = vst [vmem:[#allocation2 + $0x1e0] sm:$0xff] 0.0
    %79 = vst [vmem:[#allocation2 + $0x1e8] sm:$0xff] 0.0
    %80 = vst [vmem:[#allocation2 + $0x1f0] sm:$0xff] 0.0
    %81 = vst [vmem:[#allocation2 + $0x1f8] sm:$0xff] 0.0
  $region13: #{ck_forward.2} parent=0 // pred_fallthru
    _
  %v82 = vld [vmem:[#allocation2] sm:$0xff]
  %v83 = vld [vmem:[#allocation2 + $0x8] sm:$0xff]
  %v84 = vld [vmem:[#allocation2 + $0x10] sm:$0xff]
  %v85 = vld [vmem:[#allocation2 + $0x18] sm:$0xff]
  %v86 = vld [vmem:[#allocation2 + $0x20] sm:$0xff]
  %v87 = vld [vmem:[#allocation2 + $0x28] sm:$0xff]
  %v88 = vld [vmem:[#allocation2 + $0x30] sm:$0xff]
  %v89 = vld [vmem:[#allocation2 + $0x38] sm:$0xff]
  %v90 = vld [vmem:[#allocation2 + $0x40] sm:$0xff]
  %v91 = vld [vmem:[#allocation2 + $0x48] sm:$0xff]
  %v92 = vld [vmem:[#allocation2 + $0x50] sm:$0xff]
  %v93 = vld [vmem:[#allocation2 + $0x58] sm:$0xff]
  %v94 = vld [vmem:[#allocation2 + $0x60] sm:$0xff]
  %v95 = vld [vmem:[#allocation2 + $0x68] sm:$0xff]
  %v96 = vld [vmem:[#allocation2 + $0x70] sm:$0xff]
  %v97 = vld [vmem:[#allocation2 + $0x78] sm:$0xff]
  %v98 = vld [vmem:[#allocation2 + $0x80] sm:$0xff]
  %v99 = vld [vmem:[#allocation2 + $0x88] sm:$0xff]
  %v100 = vld [vmem:[#allocation2 + $0x90] sm:$0xff]
  %v101 = vld [vmem:[#allocation2 + $0x98] sm:$0xff]
  %v102 = vld [vmem:[#allocation2 + $0xa0] sm:$0xff]
  %v103 = vld [vmem:[#allocation2 + $0xa8] sm:$0xff]
  %v104 = vld [vmem:[#allocation2 + $0xb0] sm:$0xff]
  %v105 = vld [vmem:[#allocation2 + $0xb8] sm:$0xff]
  %v106 = vld [vmem:[#allocation2 + $0xc0] sm:$0xff]
  %v107 = vld [vmem:[#allocation2 + $0xc8] sm:$0xff]
  %v108 = vld [vmem:[#allocation2 + $0xd0] sm:$0xff]
  %v109 = vld [vmem:[#allocation2 + $0xd8] sm:$0xff]
  %v110 = vld [vmem:[#allocation2 + $0xe0] sm:$0xff]
  %v111 = vld [vmem:[#allocation2 + $0xe8] sm:$0xff]
  %v112 = vld [vmem:[#allocation2 + $0xf0] sm:$0xff]
  %v113 = vld [vmem:[#allocation2 + $0xf8] sm:$0xff]
  %v114 = vld [vmem:[#allocation2 + $0x100] sm:$0xff]
  %v115 = vld [vmem:[#allocation2 + $0x108] sm:$0xff]
  %v116 = vld [vmem:[#allocation2 + $0x110] sm:$0xff]
  %v117 = vld [vmem:[#allocation2 + $0x118] sm:$0xff]
  %v118 = vld [vmem:[#allocation2 + $0x120] sm:$0xff]
  %v119 = vld [vmem:[#allocation2 + $0x128] sm:$0xff]
  %v120 = vld [vmem:[#allocation2 + $0x130] sm:$0xff]
  %v121 = vld [vmem:[#allocation2 + $0x138] sm:$0xff]
  %v122 = vld [vmem:[#allocation2 + $0x140] sm:$0xff]
  %v123 = vld [vmem:[#allocation2 + $0x148] sm:$0xff]
  %v124 = vld [vmem:[#allocation2 + $0x150] sm:$0xff]
  %v125 = vld [vmem:[#allocation2 + $0x158] sm:$0xff]
  %v126 = vld [vmem:[#allocation2 + $0x160] sm:$0xff]
  %v127 = vld [vmem:[#allocation2 + $0x168] sm:$0xff]
  %v128 = vld [vmem:[#allocation2 + $0x170] sm:$0xff]
  %v129 = vld [vmem:[#allocation2 + $0x178] sm:$0xff]
  %v130 = vld [vmem:[#allocation2 + $0x180] sm:$0xff]
  %v131 = vld [vmem:[#allocation2 + $0x188] sm:$0xff]
  %v132 = vld [vmem:[#allocation2 + $0x190] sm:$0xff]
  %v133 = vld [vmem:[#allocation2 + $0x198] sm:$0xff]
  %v134 = vld [vmem:[#allocation2 + $0x1a0] sm:$0xff]
  %v135 = vld [vmem:[#allocation2 + $0x1a8] sm:$0xff]
  %v136 = vld [vmem:[#allocation2 + $0x1b0] sm:$0xff]
  %v137 = vld [vmem:[#allocation2 + $0x1b8] sm:$0xff]
  %v138 = vld [vmem:[#allocation2 + $0x1c0] sm:$0xff]
  %v139 = vld [vmem:[#allocation2 + $0x1c8] sm:$0xff]
  %v140 = vld [vmem:[#allocation2 + $0x1d0] sm:$0xff]
  %v141 = vld [vmem:[#allocation2 + $0x1d8] sm:$0xff]
  %v142 = vld [vmem:[#allocation2 + $0x1e0] sm:$0xff]
  %v143 = vld [vmem:[#allocation2 + $0x1e8] sm:$0xff]
  %v144 = vld [vmem:[#allocation2 + $0x1f0] sm:$0xff]
  %v145 = vld [vmem:[#allocation2 + $0x1f8] sm:$0xff]
  %v146 = vld [vmem:[%s0] sm:$0xf]
  %v147 = vld [vmem:[%s0 + $0x4] sm:$0xf]
  %v148 = vld [vmem:[%s0 + $0x8] sm:$0xf]
  %v149 = vld [vmem:[%s0 + $0xc] sm:$0xf]
  %v150 = vld [vmem:[%s0 + $0x10] sm:$0xf]
  %v151 = vld [vmem:[%s0 + $0x14] sm:$0xf]
  %v152 = vld [vmem:[%s0 + $0x18] sm:$0xf]
  %v153 = vld [vmem:[%s0 + $0x1c] sm:$0xf]
  %v154 = vld [vmem:[%s0 + $0x20] sm:$0xf]
  %v155 = vld [vmem:[%s0 + $0x24] sm:$0xf]
  %v156 = vld [vmem:[%s0 + $0x28] sm:$0xf]
  %v157 = vld [vmem:[%s0 + $0x2c] sm:$0xf]
  %v158 = vld [vmem:[%s0 + $0x30] sm:$0xf]
  %v159 = vld [vmem:[%s0 + $0x34] sm:$0xf]
  %v160 = vld [vmem:[%s0 + $0x38] sm:$0xf]
  %v161 = vld [vmem:[%s0 + $0x3c] sm:$0xf]
  %v162 = vld [vmem:[%s0 + $0x40] sm:$0xf]
  %v163 = vld [vmem:[%s0 + $0x44] sm:$0xf]
  %v164 = vld [vmem:[%s0 + $0x48] sm:$0xf]
  %v165 = vld [vmem:[%s0 + $0x4c] sm:$0xf]
  %v166 = vld [vmem:[%s0 + $0x50] sm:$0xf]
  %v167 = vld [vmem:[%s0 + $0x54] sm:$0xf]
  %v168 = vld [vmem:[%s0 + $0x58] sm:$0xf]
  %v169 = vld [vmem:[%s0 + $0x5c] sm:$0xf]
  %v170 = vld [vmem:[%s0 + $0x60] sm:$0xf]
  %v171 = vld [vmem:[%s0 + $0x64] sm:$0xf]
  %v172 = vld [vmem:[%s0 + $0x68] sm:$0xf]
  %v173 = vld [vmem:[%s0 + $0x6c] sm:$0xf]
  %v174 = vld [vmem:[%s0 + $0x70] sm:$0xf]
  %v175 = vld [vmem:[%s0 + $0x74] sm:$0xf]
  %v176 = vld [vmem:[%s0 + $0x78] sm:$0xf]
  %v177 = vld [vmem:[%s0 + $0x7c] sm:$0xf]
  %v178 = vld [vmem:[%s0 + $0x80] sm:$0xf]
  %v179 = vld [vmem:[%s0 + $0x84] sm:$0xf]
  %v180 = vld [vmem:[%s0 + $0x88] sm:$0xf]
  %v181 = vld [vmem:[%s0 + $0x8c] sm:$0xf]
  %v182 = vld [vmem:[%s0 + $0x90] sm:$0xf]
  %v183 = vld [vmem:[%s0 + $0x94] sm:$0xf]
  %v184 = vld [vmem:[%s0 + $0x98] sm:$0xf]
  %v185 = vld [vmem:[%s0 + $0x9c] sm:$0xf]
  %v186 = vld [vmem:[%s0 + $0xa0] sm:$0xf]
  %v187 = vld [vmem:[%s0 + $0xa4] sm:$0xf]
  %v188 = vld [vmem:[%s0 + $0xa8] sm:$0xf]
  %v189 = vld [vmem:[%s0 + $0xac] sm:$0xf]
  %v190 = vld [vmem:[%s0 + $0xb0] sm:$0xf]
  %v191 = vld [vmem:[%s0 + $0xb4] sm:$0xf]
  %v192 = vld [vmem:[%s0 + $0xb8] sm:$0xf]
  %v193 = vld [vmem:[%s0 + $0xbc] sm:$0xf]
  %v194 = vld [vmem:[%s0 + $0xc0] sm:$0xf]
  %v195 = vld [vmem:[%s0 + $0xc4] sm:$0xf]
  %v196 = vld [vmem:[%s0 + $0xc8] sm:$0xf]
  %v197 = vld [vmem:[%s0 + $0xcc] sm:$0xf]
  %v198 = vld [vmem:[%s0 + $0xd0] sm:$0xf]
  %v199 = vld [vmem:[%s0 + $0xd4] sm:$0xf]
  %v200 = vld [vmem:[%s0 + $0xd8] sm:$0xf]
  %v201 = vld [vmem:[%s0 + $0xdc] sm:$0xf]
  %v202 = vld [vmem:[%s0 + $0xe0] sm:$0xf]
  %v203 = vld [vmem:[%s0 + $0xe4] sm:$0xf]
  %v204 = vld [vmem:[%s0 + $0xe8] sm:$0xf]
  %v205 = vld [vmem:[%s0 + $0xec] sm:$0xf]
  %v206 = vld [vmem:[%s0 + $0xf0] sm:$0xf]
  %v207 = vld [vmem:[%s0 + $0xf4] sm:$0xf]
  %v208 = vld [vmem:[%s0 + $0xf8] sm:$0xf]
  %v209 = vld [vmem:[%s0 + $0xfc] sm:$0xf]
  %v210 = vld [vmem:[%s1] sm:$0xf]
  %v211 = vld [vmem:[%s1 + $0x4] sm:$0xf]
  %v212 = vld [vmem:[%s1 + $0x8] sm:$0xf]
  %v213 = vld [vmem:[%s1 + $0xc] sm:$0xf]
  %v214 = vld [vmem:[%s1 + $0x10] sm:$0xf]
  %v215 = vld [vmem:[%s1 + $0x14] sm:$0xf]
  %v216 = vld [vmem:[%s1 + $0x18] sm:$0xf]
  %v217 = vld [vmem:[%s1 + $0x1c] sm:$0xf]
  %v282 = vunpack.c.l.b16 %v146
  %v283 = vunpack.c.l.b16 %v147
  %v284 = vunpack.c.l.b16 %v148
  %v285 = vunpack.c.l.b16 %v149
  %v286 = vunpack.c.l.b16 %v150
  %v287 = vunpack.c.l.b16 %v151
  %v288 = vunpack.c.l.b16 %v152
  %v289 = vunpack.c.l.b16 %v153
  %v290 = vunpack.c.l.b16 %v154
  %v291 = vunpack.c.l.b16 %v155
  %v292 = vunpack.c.l.b16 %v156
  %v293 = vunpack.c.l.b16 %v157
  %v294 = vunpack.c.l.b16 %v158
  %v295 = vunpack.c.l.b16 %v159
  %v296 = vunpack.c.l.b16 %v160
  %v297 = vunpack.c.l.b16 %v161
  %v298 = vunpack.c.l.b16 %v162
  %v299 = vunpack.c.l.b16 %v163
  %v300 = vunpack.c.l.b16 %v164
  %v301 = vunpack.c.l.b16 %v165
  %v302 = vunpack.c.l.b16 %v166
  %v303 = vunpack.c.l.b16 %v167
  %v304 = vunpack.c.l.b16 %v168
  %v305 = vunpack.c.l.b16 %v169
  %v306 = vunpack.c.l.b16 %v170
  %v307 = vunpack.c.l.b16 %v171
  %v308 = vunpack.c.l.b16 %v172
  %v309 = vunpack.c.l.b16 %v173
  %v310 = vunpack.c.l.b16 %v174
  %v311 = vunpack.c.l.b16 %v175
  %v312 = vunpack.c.l.b16 %v176
  %v313 = vunpack.c.l.b16 %v177
  %v314 = vunpack.c.l.b16 %v178
  %v315 = vunpack.c.l.b16 %v179
  %v316 = vunpack.c.l.b16 %v180
  %v317 = vunpack.c.l.b16 %v181
  %v318 = vunpack.c.l.b16 %v182
  %v319 = vunpack.c.l.b16 %v183
  %v320 = vunpack.c.l.b16 %v184
  %v321 = vunpack.c.l.b16 %v185
  %v322 = vunpack.c.l.b16 %v186
  %v323 = vunpack.c.l.b16 %v187
  %v324 = vunpack.c.l.b16 %v188
  %v325 = vunpack.c.l.b16 %v189
  %v326 = vunpack.c.l.b16 %v190
  %v327 = vunpack.c.l.b16 %v191
  %v328 = vunpack.c.l.b16 %v192
  %v329 = vunpack.c.l.b16 %v193
  %v330 = vunpack.c.l.b16 %v194
  %v331 = vunpack.c.l.b16 %v195
  %v332 = vunpack.c.l.b16 %v196
  %v333 = vunpack.c.l.b16 %v197
  %v334 = vunpack.c.l.b16 %v198
  %v335 = vunpack.c.l.b16 %v199
  %v336 = vunpack.c.l.b16 %v200
  %v337 = vunpack.c.l.b16 %v201
  %v338 = vunpack.c.l.b16 %v202
  %v339 = vunpack.c.l.b16 %v203
  %v340 = vunpack.c.l.b16 %v204
  %v341 = vunpack.c.l.b16 %v205
  %v342 = vunpack.c.l.b16 %v206
  %v343 = vunpack.c.l.b16 %v207
  %v344 = vunpack.c.l.b16 %v208
  %v345 = vunpack.c.l.b16 %v209
  %v346 = vpack.c.b16 %v283, %v282
  %v347 = vpack.c.b16 %v285, %v284
  %v348 = vpack.c.b16 %v287, %v286
  %v349 = vpack.c.b16 %v289, %v288
  %v350 = vpack.c.b16 %v291, %v290
  %v351 = vpack.c.b16 %v293, %v292
  %v352 = vpack.c.b16 %v295, %v294
  %v353 = vpack.c.b16 %v297, %v296
  %v354 = vpack.c.b16 %v299, %v298
  %v355 = vpack.c.b16 %v301, %v300
  %v356 = vpack.c.b16 %v303, %v302
  %v357 = vpack.c.b16 %v305, %v304
  %v358 = vpack.c.b16 %v307, %v306
  %v359 = vpack.c.b16 %v309, %v308
  %v360 = vpack.c.b16 %v311, %v310
  %v361 = vpack.c.b16 %v313, %v312
  %v362 = vpack.c.b16 %v315, %v314
  %v363 = vpack.c.b16 %v317, %v316
  %v364 = vpack.c.b16 %v319, %v318
  %v365 = vpack.c.b16 %v321, %v320
  %v366 = vpack.c.b16 %v323, %v322
  %v367 = vpack.c.b16 %v325, %v324
  %v368 = vpack.c.b16 %v327, %v326
  %v369 = vpack.c.b16 %v329, %v328
  %v370 = vpack.c.b16 %v331, %v330
  %v371 = vpack.c.b16 %v333, %v332
  %v372 = vpack.c.b16 %v335, %v334
  %v373 = vpack.c.b16 %v337, %v336
  %v374 = vpack.c.b16 %v339, %v338
  %v375 = vpack.c.b16 %v341, %v340
  %v376 = vpack.c.b16 %v343, %v342
  %v377 = vpack.c.b16 %v345, %v344
  %v386 = vunpack.c.l.b16 %v210
  %v387 = vunpack.c.l.b16 %v211
  %v388 = vunpack.c.l.b16 %v212
  %v389 = vunpack.c.l.b16 %v213
  %v390 = vunpack.c.l.b16 %v214
  %v391 = vunpack.c.l.b16 %v215
  %v392 = vunpack.c.l.b16 %v216
  %v393 = vunpack.c.l.b16 %v217
  %v394 = vpack.c.b16 %v387, %v386
  %v395 = vpack.c.b16 %v389, %v388
  %v396 = vpack.c.b16 %v391, %v390
  %v397 = vpack.c.b16 %v393, %v392
  %vm402 = vcmask 523264
  %v404 = vsel %vm402, %v346, 0
  %v407 = vsel %vm402, %v347, 0
  %v410 = vsel %vm402, %v348, 0
  %v413 = vsel %vm402, %v349, 0
  %v416 = vsel %vm402, %v350, 0
  %v419 = vsel %vm402, %v351, 0
  %v422 = vsel %vm402, %v352, 0
  %v425 = vsel %vm402, %v353, 0
  %v428 = vsel %vm402, %v354, 0
  %v431 = vsel %vm402, %v355, 0
  %v434 = vsel %vm402, %v356, 0
  %v437 = vsel %vm402, %v357, 0
  %v440 = vsel %vm402, %v358, 0
  %v443 = vsel %vm402, %v359, 0
  %v446 = vsel %vm402, %v360, 0
  %v449 = vsel %vm402, %v361, 0
  %v452 = vsel %vm402, %v362, 0
  %v455 = vsel %vm402, %v363, 0
  %v458 = vsel %vm402, %v364, 0
  %v461 = vsel %vm402, %v365, 0
  %v464 = vsel %vm402, %v366, 0
  %v467 = vsel %vm402, %v367, 0
  %v470 = vsel %vm402, %v368, 0
  %v473 = vsel %vm402, %v369, 0
  %v476 = vsel %vm402, %v370, 0
  %v479 = vsel %vm402, %v371, 0
  %v482 = vsel %vm402, %v372, 0
  %v485 = vsel %vm402, %v373, 0
  %v488 = vsel %vm402, %v374, 0
  %v491 = vsel %vm402, %v375, 0
  %v494 = vsel %vm402, %v376, 0
  %v497 = vsel %vm402, %v377, 0
  %499 = vmatprep.subr.bf16.mxu0 0
  %500 = vmatpush1.bf16.msra.mxu0 0
  %501 = vmatprep.subr.bf16.mxu0 0
  %502 = vmatpush1.bf16.msra.mxu0 0
  %503 = vmatprep.subr.bf16.mxu0 0
  %504 = vmatpush1.bf16.msra.mxu0 0
  %505 = vmatprep.subr.bf16.mxu0 0
  %506 = vmatpush1.bf16.msra.mxu0 0
  %507 = vmatprep.subr.bf16.mxu0 0
  %508 = vmatpush1.bf16.msra.mxu0 %v397
  %509 = vmatprep.subr.bf16.mxu0 0
  %510 = vmatpush1.bf16.msra.mxu0 %v396
  %511 = vmatprep.subr.bf16.mxu0 0
  %512 = vmatpush1.bf16.msra.mxu0 %v395
  %513 = vmatprep.subr.bf16.mxu0 0
  %514 = vmatpush1.bf16.msra.mxu0 %v394
  %515 = vmatprep.subr.bf16.mxu0 0
  %516 = vmatpush2.bf16.msra.mxu0 0
  %517 = vmatprep.subr.bf16.mxu0 0
  %518 = vmatpush2.bf16.msra.mxu0 0
  %519 = vmatprep.subr.bf16.mxu0 0
  %520 = vmatpush2.bf16.msra.mxu0 0
  %521 = vmatprep.subr.bf16.mxu0 0
  %522 = vmatpush2.bf16.msra.mxu0 0
  %523 = vmatprep.subr.bf16.mxu0 0
  %524 = vmatpush2.bf16.msra.mxu0 0
  %525 = vmatprep.subr.bf16.mxu0 0
  %526 = vmatpush2.bf16.msra.mxu0 0
  %527 = vmatprep.subr.bf16.mxu0 0
  %528 = vmatpush2.bf16.msra.mxu0 0
  %529 = vmatprep.subr.bf16.mxu0 0
  %530 = vmatpush2.bf16.msra.mxu0 0
  %531 = vmatprep.mubr.bf16.mxu0 0
  %532 = vmatmul.mubr.bf16.gmra.mxu0 %v404
  %v533 = vpop.f32.mrf.mxu0
  %v534 = vadd.f32 0.0, %v533
  %v535 = vpop.f32.mrf.mxu0
  %v536 = vpop.f32.mrf.mxu0
  %v537 = vadd.f32 0.0, %v536
  %v538 = vpop.f32.mrf.mxu0
  %539 = vmatprep.mubr.bf16.mxu0 0
  %540 = vmatmul.mubr.bf16.gmra.mxu0 %v407
  %v541 = vpop.f32.mrf.mxu0
  %v542 = vadd.f32 0.0, %v541
  %v543 = vpop.f32.mrf.mxu0
  %v544 = vpop.f32.mrf.mxu0
  %v545 = vadd.f32 0.0, %v544
  %v546 = vpop.f32.mrf.mxu0
  %547 = vmatprep.mubr.bf16.mxu0 0
  %548 = vmatmul.mubr.bf16.gmra.mxu0 %v410
  %v549 = vpop.f32.mrf.mxu0
  %v550 = vadd.f32 0.0, %v549
  %v551 = vpop.f32.mrf.mxu0
  %v552 = vpop.f32.mrf.mxu0
  %v553 = vadd.f32 0.0, %v552
  %v554 = vpop.f32.mrf.mxu0
  %555 = vmatprep.mubr.bf16.mxu0 0
  %556 = vmatmul.mubr.bf16.gmra.mxu0 %v413
  %v557 = vpop.f32.mrf.mxu0
  %v558 = vadd.f32 0.0, %v557
  %v559 = vpop.f32.mrf.mxu0
  %v560 = vpop.f32.mrf.mxu0
  %v561 = vadd.f32 0.0, %v560
  %v562 = vpop.f32.mrf.mxu0
  %563 = vmatprep.mubr.bf16.mxu0 0
  %564 = vmatmul.mubr.bf16.gmra.mxu0 %v416
  %v565 = vpop.f32.mrf.mxu0
  %v566 = vadd.f32 0.0, %v565
  %v567 = vpop.f32.mrf.mxu0
  %v568 = vpop.f32.mrf.mxu0
  %v569 = vadd.f32 0.0, %v568
  %v570 = vpop.f32.mrf.mxu0
  %571 = vmatprep.mubr.bf16.mxu0 0
  %572 = vmatmul.mubr.bf16.gmra.mxu0 %v419
  %v573 = vpop.f32.mrf.mxu0
  %v574 = vadd.f32 0.0, %v573
  %v575 = vpop.f32.mrf.mxu0
  %v576 = vpop.f32.mrf.mxu0
  %v577 = vadd.f32 0.0, %v576
  %v578 = vpop.f32.mrf.mxu0
  %579 = vmatprep.mubr.bf16.mxu0 0
  %580 = vmatmul.mubr.bf16.gmra.mxu0 %v422
  %v581 = vpop.f32.mrf.mxu0
  %v582 = vadd.f32 0.0, %v581
  %v583 = vpop.f32.mrf.mxu0
  %v584 = vpop.f32.mrf.mxu0
  %v585 = vadd.f32 0.0, %v584
  %v586 = vpop.f32.mrf.mxu0
  %587 = vmatprep.mubr.bf16.mxu0 0
  %588 = vmatmul.mubr.bf16.gmra.mxu0 %v425
  %v589 = vpop.f32.mrf.mxu0
  %v590 = vadd.f32 0.0, %v589
  %v591 = vpop.f32.mrf.mxu0
  %v592 = vpop.f32.mrf.mxu0
  %v593 = vadd.f32 0.0, %v592
  %v594 = vpop.f32.mrf.mxu0
  %595 = vmatprep.mubr.bf16.mxu0 0
  %596 = vmatmul.mubr.bf16.gmra.mxu0 %v428
  %v597 = vpop.f32.mrf.mxu0
  %v598 = vadd.f32 0.0, %v597
  %v599 = vpop.f32.mrf.mxu0
  %v600 = vpop.f32.mrf.mxu0
  %v601 = vadd.f32 0.0, %v600
  %v602 = vpop.f32.mrf.mxu0
  %603 = vmatprep.mubr.bf16.mxu0 0
  %604 = vmatmul.mubr.bf16.gmra.mxu0 %v431
  %v605 = vpop.f32.mrf.mxu0
  %v606 = vadd.f32 0.0, %v605
  %v607 = vpop.f32.mrf.mxu0
  %v608 = vpop.f32.mrf.mxu0
  %v609 = vadd.f32 0.0, %v608
  %v610 = vpop.f32.mrf.mxu0
  %611 = vmatprep.mubr.bf16.mxu0 0
  %612 = vmatmul.mubr.bf16.gmra.mxu0 %v434
  %v613 = vpop.f32.mrf.mxu0
  %v614 = vadd.f32 0.0, %v613
  %v615 = vpop.f32.mrf.mxu0
  %v616 = vpop.f32.mrf.mxu0
  %v617 = vadd.f32 0.0, %v616
  %v618 = vpop.f32.mrf.mxu0
  %619 = vmatprep.mubr.bf16.mxu0 0
  %620 = vmatmul.mubr.bf16.gmra.mxu0 %v437
  %v621 = vpop.f32.mrf.mxu0
  %v622 = vadd.f32 0.0, %v621
  %v623 = vpop.f32.mrf.mxu0
  %v624 = vpop.f32.mrf.mxu0
  %v625 = vadd.f32 0.0, %v624
  %v626 = vpop.f32.mrf.mxu0
  %627 = vmatprep.mubr.bf16.mxu0 0
  %628 = vmatmul.mubr.bf16.gmra.mxu0 %v440
  %v629 = vpop.f32.mrf.mxu0
  %v630 = vadd.f32 0.0, %v629
  %v631 = vpop.f32.mrf.mxu0
  %v632 = vpop.f32.mrf.mxu0
  %v633 = vadd.f32 0.0, %v632
  %v634 = vpop.f32.mrf.mxu0
  %635 = vmatprep.mubr.bf16.mxu0 0
  %636 = vmatmul.mubr.bf16.gmra.mxu0 %v443
  %v637 = vpop.f32.mrf.mxu0
  %v638 = vadd.f32 0.0, %v637
  %v639 = vpop.f32.mrf.mxu0
  %v640 = vpop.f32.mrf.mxu0
  %v641 = vadd.f32 0.0, %v640
  %v642 = vpop.f32.mrf.mxu0
  %643 = vmatprep.mubr.bf16.mxu0 0
  %644 = vmatmul.mubr.bf16.gmra.mxu0 %v446
  %v645 = vpop.f32.mrf.mxu0
  %v646 = vadd.f32 0.0, %v645
  %v647 = vpop.f32.mrf.mxu0
  %v648 = vpop.f32.mrf.mxu0
  %v649 = vadd.f32 0.0, %v648
  %v650 = vpop.f32.mrf.mxu0
  %651 = vmatprep.mubr.bf16.mxu0 0
  %652 = vmatmul.mubr.bf16.gmra.mxu0 %v449
  %v653 = vpop.f32.mrf.mxu0
  %v654 = vadd.f32 0.0, %v653
  %v655 = vpop.f32.mrf.mxu0
  %v656 = vpop.f32.mrf.mxu0
  %v657 = vadd.f32 0.0, %v656
  %v658 = vpop.f32.mrf.mxu0
  %659 = vmatprep.mubr.bf16.mxu0 0
  %660 = vmatmul.mubr.bf16.gmra.mxu0 %v452
  %v661 = vpop.f32.mrf.mxu0
  %v662 = vadd.f32 0.0, %v661
  %v663 = vpop.f32.mrf.mxu0
  %v664 = vpop.f32.mrf.mxu0
  %v665 = vadd.f32 0.0, %v664
  %v666 = vpop.f32.mrf.mxu0
  %667 = vmatprep.mubr.bf16.mxu0 0
  %668 = vmatmul.mubr.bf16.gmra.mxu0 %v455
  %v669 = vpop.f32.mrf.mxu0
  %v670 = vadd.f32 0.0, %v669
  %v671 = vpop.f32.mrf.mxu0
  %v672 = vpop.f32.mrf.mxu0
  %v673 = vadd.f32 0.0, %v672
  %v674 = vpop.f32.mrf.mxu0
  %675 = vmatprep.mubr.bf16.mxu0 0
  %676 = vmatmul.mubr.bf16.gmra.mxu0 %v458
  %v677 = vpop.f32.mrf.mxu0
  %v678 = vadd.f32 0.0, %v677
  %v679 = vpop.f32.mrf.mxu0
  %v680 = vpop.f32.mrf.mxu0
  %v681 = vadd.f32 0.0, %v680
  %v682 = vpop.f32.mrf.mxu0
  %683 = vmatprep.mubr.bf16.mxu0 0
  %684 = vmatmul.mubr.bf16.gmra.mxu0 %v461
  %v685 = vpop.f32.mrf.mxu0
  %v686 = vadd.f32 0.0, %v685
  %v687 = vpop.f32.mrf.mxu0
  %v688 = vpop.f32.mrf.mxu0
  %v689 = vadd.f32 0.0, %v688
  %v690 = vpop.f32.mrf.mxu0
  %691 = vmatprep.mubr.bf16.mxu0 0
  %692 = vmatmul.mubr.bf16.gmra.mxu0 %v464
  %v693 = vpop.f32.mrf.mxu0
  %v694 = vadd.f32 0.0, %v693
  %v695 = vpop.f32.mrf.mxu0
  %v696 = vpop.f32.mrf.mxu0
  %v697 = vadd.f32 0.0, %v696
  %v698 = vpop.f32.mrf.mxu0
  %699 = vmatprep.mubr.bf16.mxu0 0
  %700 = vmatmul.mubr.bf16.gmra.mxu0 %v467
  %v701 = vpop.f32.mrf.mxu0
  %v702 = vadd.f32 0.0, %v701
  %v703 = vpop.f32.mrf.mxu0
  %v704 = vpop.f32.mrf.mxu0
  %v705 = vadd.f32 0.0, %v704
  %v706 = vpop.f32.mrf.mxu0
  %707 = vmatprep.mubr.bf16.mxu0 0
  %708 = vmatmul.mubr.bf16.gmra.mxu0 %v470
  %v709 = vpop.f32.mrf.mxu0
  %v710 = vadd.f32 0.0, %v709
  %v711 = vpop.f32.mrf.mxu0
  %v712 = vpop.f32.mrf.mxu0
  %v713 = vadd.f32 0.0, %v712
  %v714 = vpop.f32.mrf.mxu0
  %715 = vmatprep.mubr.bf16.mxu0 0
  %716 = vmatmul.mubr.bf16.gmra.mxu0 %v473
  %v717 = vpop.f32.mrf.mxu0
  %v718 = vadd.f32 0.0, %v717
  %v719 = vpop.f32.mrf.mxu0
  %v720 = vpop.f32.mrf.mxu0
  %v721 = vadd.f32 0.0, %v720
  %v722 = vpop.f32.mrf.mxu0
  %723 = vmatprep.mubr.bf16.mxu0 0
  %724 = vmatmul.mubr.bf16.gmra.mxu0 %v476
  %v725 = vpop.f32.mrf.mxu0
  %v726 = vadd.f32 0.0, %v725
  %v727 = vpop.f32.mrf.mxu0
  %v728 = vpop.f32.mrf.mxu0
  %v729 = vadd.f32 0.0, %v728
  %v730 = vpop.f32.mrf.mxu0
  %731 = vmatprep.mubr.bf16.mxu0 0
  %732 = vmatmul.mubr.bf16.gmra.mxu0 %v479
  %v733 = vpop.f32.mrf.mxu0
  %v734 = vadd.f32 0.0, %v733
  %v735 = vpop.f32.mrf.mxu0
  %v736 = vpop.f32.mrf.mxu0
  %v737 = vadd.f32 0.0, %v736
  %v738 = vpop.f32.mrf.mxu0
  %739 = vmatprep.mubr.bf16.mxu0 0
  %740 = vmatmul.mubr.bf16.gmra.mxu0 %v482
  %v741 = vpop.f32.mrf.mxu0
  %v742 = vadd.f32 0.0, %v741
  %v743 = vpop.f32.mrf.mxu0
  %v744 = vpop.f32.mrf.mxu0
  %v745 = vadd.f32 0.0, %v744
  %v746 = vpop.f32.mrf.mxu0
  %747 = vmatprep.mubr.bf16.mxu0 0
  %748 = vmatmul.mubr.bf16.gmra.mxu0 %v485
  %v749 = vpop.f32.mrf.mxu0
  %v750 = vadd.f32 0.0, %v749
  %v751 = vpop.f32.mrf.mxu0
  %v752 = vpop.f32.mrf.mxu0
  %v753 = vadd.f32 0.0, %v752
  %v754 = vpop.f32.mrf.mxu0
  %755 = vmatprep.mubr.bf16.mxu0 0
  %756 = vmatmul.mubr.bf16.gmra.mxu0 %v488
  %v757 = vpop.f32.mrf.mxu0
  %v758 = vadd.f32 0.0, %v757
  %v759 = vpop.f32.mrf.mxu0
  %v760 = vpop.f32.mrf.mxu0
  %v761 = vadd.f32 0.0, %v760
  %v762 = vpop.f32.mrf.mxu0
  %763 = vmatprep.mubr.bf16.mxu0 0
  %764 = vmatmul.mubr.bf16.gmra.mxu0 %v491
  %v765 = vpop.f32.mrf.mxu0
  %v766 = vadd.f32 0.0, %v765
  %v767 = vpop.f32.mrf.mxu0
  %v768 = vpop.f32.mrf.mxu0
  %v769 = vadd.f32 0.0, %v768
  %v770 = vpop.f32.mrf.mxu0
  %771 = vmatprep.mubr.bf16.mxu0 0
  %772 = vmatmul.mubr.bf16.gmra.mxu0 %v494
  %v773 = vpop.f32.mrf.mxu0
  %v774 = vadd.f32 0.0, %v773
  %v775 = vpop.f32.mrf.mxu0
  %v776 = vpop.f32.mrf.mxu0
  %v777 = vadd.f32 0.0, %v776
  %v778 = vpop.f32.mrf.mxu0
  %779 = vmatprep.mubr.bf16.mxu0 0
  %780 = vmatmul.mubr.bf16.gmra.mxu0 %v497
  %v781 = vpop.f32.mrf.mxu0
  %v782 = vadd.f32 0.0, %v781
  %v783 = vpop.f32.mrf.mxu0
  %v784 = vpop.f32.mrf.mxu0
  %v785 = vadd.f32 0.0, %v784
  %v786 = vpop.f32.mrf.mxu0
  %787 = vdwg.mxu0
  %v788 = vadd.f32 %v82, %v534
  %v789 = vadd.f32 %v83, %v537
  %v790 = vadd.f32 %v84, %v542
  %v791 = vadd.f32 %v85, %v545
  %v792 = vadd.f32 %v86, %v550
  %v793 = vadd.f32 %v87, %v553
  %v794 = vadd.f32 %v88, %v558
  %v795 = vadd.f32 %v89, %v561
  %v796 = vadd.f32 %v90, %v566
  %v797 = vadd.f32 %v91, %v569
  %v798 = vadd.f32 %v92, %v574
  %v799 = vadd.f32 %v93, %v577
  %v800 = vadd.f32 %v94, %v582
  %v801 = vadd.f32 %v95, %v585
  %v802 = vadd.f32 %v96, %v590
  %v803 = vadd.f32 %v97, %v593
  %v804 = vadd.f32 %v98, %v598
  %v805 = vadd.f32 %v99, %v601
  %v806 = vadd.f32 %v100, %v606
  %v807 = vadd.f32 %v101, %v609
  %v808 = vadd.f32 %v102, %v614
  %v809 = vadd.f32 %v103, %v617
  %v810 = vadd.f32 %v104, %v622
  %v811 = vadd.f32 %v105, %v625
  %v812 = vadd.f32 %v106, %v630
  %v813 = vadd.f32 %v107, %v633
  %v814 = vadd.f32 %v108, %v638
  %v815 = vadd.f32 %v109, %v641
  %v816 = vadd.f32 %v110, %v646
  %v817 = vadd.f32 %v111, %v649
  %v818 = vadd.f32 %v112, %v654
  %v819 = vadd.f32 %v113, %v657
  %v820 = vadd.f32 %v114, %v662
  %v821 = vadd.f32 %v115, %v665
  %v822 = vadd.f32 %v116, %v670
  %v823 = vadd.f32 %v117, %v673
  %v824 = vadd.f32 %v118, %v678
  %v825 = vadd.f32 %v119, %v681
  %v826 = vadd.f32 %v120, %v686
  %v827 = vadd.f32 %v121, %v689
  %v828 = vadd.f32 %v122, %v694
  %v829 = vadd.f32 %v123, %v697
  %v830 = vadd.f32 %v124, %v702
  %v831 = vadd.f32 %v125, %v705
  %v832 = vadd.f32 %v126, %v710
  %v833 = vadd.f32 %v127, %v713
  %v834 = vadd.f32 %v128, %v718
  %v835 = vadd.f32 %v129, %v721
  %v836 = vadd.f32 %v130, %v726
  %v837 = vadd.f32 %v131, %v729
  %v838 = vadd.f32 %v132, %v734
  %v839 = vadd.f32 %v133, %v737
  %v840 = vadd.f32 %v134, %v742
  %v841 = vadd.f32 %v135, %v745
  %v842 = vadd.f32 %v136, %v750
  %v843 = vadd.f32 %v137, %v753
  %v844 = vadd.f32 %v138, %v758
  %v845 = vadd.f32 %v139, %v761
  %v846 = vadd.f32 %v140, %v766
  %v847 = vadd.f32 %v141, %v769
  %v848 = vadd.f32 %v142, %v774
  %v849 = vadd.f32 %v143, %v777
  %v850 = vadd.f32 %v144, %v782
  %v851 = vadd.f32 %v145, %v785
  %852 = vst [vmem:[#allocation2] sm:$0xff] %v788
  %853 = vst [vmem:[#allocation2 + $0x8] sm:$0xff] %v789
  %854 = vst [vmem:[#allocation2 + $0x10] sm:$0xff] %v790
  %855 = vst [vmem:[#allocation2 + $0x18] sm:$0xff] %v791
  %856 = vst [vmem:[#allocation2 + $0x20] sm:$0xff] %v792
  %857 = vst [vmem:[#allocation2 + $0x28] sm:$0xff] %v793
  %858 = vst [vmem:[#allocation2 + $0x30] sm:$0xff] %v794
  %859 = vst [vmem:[#allocation2 + $0x38] sm:$0xff] %v795
  %860 = vst [vmem:[#allocation2 + $0x40] sm:$0xff] %v796
  %861 = vst [vmem:[#allocation2 + $0x48] sm:$0xff] %v797
  %862 = vst [vmem:[#allocation2 + $0x50] sm:$0xff] %v798
  %863 = vst [vmem:[#allocation2 + $0x58] sm:$0xff] %v799
  %864 = vst [vmem:[#allocation2 + $0x60] sm:$0xff] %v800
  %865 = vst [vmem:[#allocation2 + $0x68] sm:$0xff] %v801
  %866 = vst [vmem:[#allocation2 + $0x70] sm:$0xff] %v802
  %867 = vst [vmem:[#allocation2 + $0x78] sm:$0xff] %v803
  %868 = vst [vmem:[#allocation2 + $0x80] sm:$0xff] %v804
  %869 = vst [vmem:[#allocation2 + $0x88] sm:$0xff] %v805
  %870 = vst [vmem:[#allocation2 + $0x90] sm:$0xff] %v806
  %871 = vst [vmem:[#allocation2 + $0x98] sm:$0xff] %v807
  %872 = vst [vmem:[#allocation2 + $0xa0] sm:$0xff] %v808
  %873 = vst [vmem:[#allocation2 + $0xa8] sm:$0xff] %v809
  %874 = vst [vmem:[#allocation2 + $0xb0] sm:$0xff] %v810
  %875 = vst [vmem:[#allocation2 + $0xb8] sm:$0xff] %v811
  %876 = vst [vmem:[#allocation2 + $0xc0] sm:$0xff] %v812
  %877 = vst [vmem:[#allocation2 + $0xc8] sm:$0xff] %v813
  %878 = vst [vmem:[#allocation2 + $0xd0] sm:$0xff] %v814
  %879 = vst [vmem:[#allocation2 + $0xd8] sm:$0xff] %v815
  %880 = vst [vmem:[#allocation2 + $0xe0] sm:$0xff] %v816
  %881 = vst [vmem:[#allocation2 + $0xe8] sm:$0xff] %v817
  %882 = vst [vmem:[#allocation2 + $0xf0] sm:$0xff] %v818
  %883 = vst [vmem:[#allocation2 + $0xf8] sm:$0xff] %v819
  %884 = vst [vmem:[#allocation2 + $0x100] sm:$0xff] %v820
  %885 = vst [vmem:[#allocation2 + $0x108] sm:$0xff] %v821
  %886 = vst [vmem:[#allocation2 + $0x110] sm:$0xff] %v822
  %887 = vst [vmem:[#allocation2 + $0x118] sm:$0xff] %v823
  %888 = vst [vmem:[#allocation2 + $0x120] sm:$0xff] %v824
  %889 = vst [vmem:[#allocation2 + $0x128] sm:$0xff] %v825
  %890 = vst [vmem:[#allocation2 + $0x130] sm:$0xff] %v826
  %891 = vst [vmem:[#allocation2 + $0x138] sm:$0xff] %v827
  %892 = vst [vmem:[#allocation2 + $0x140] sm:$0xff] %v828
  %893 = vst [vmem:[#allocation2 + $0x148] sm:$0xff] %v829
  %894 = vst [vmem:[#allocation2 + $0x150] sm:$0xff] %v830
  %895 = vst [vmem:[#allocation2 + $0x158] sm:$0xff] %v831
  %896 = vst [vmem:[#allocation2 + $0x160] sm:$0xff] %v832
  %897 = vst [vmem:[#allocation2 + $0x168] sm:$0xff] %v833
  %898 = vst [vmem:[#allocation2 + $0x170] sm:$0xff] %v834
  %899 = vst [vmem:[#allocation2 + $0x178] sm:$0xff] %v835
  %900 = vst [vmem:[#allocation2 + $0x180] sm:$0xff] %v836
  %901 = vst [vmem:[#allocation2 + $0x188] sm:$0xff] %v837
  %902 = vst [vmem:[#allocation2 + $0x190] sm:$0xff] %v838
  %903 = vst [vmem:[#allocation2 + $0x198] sm:$0xff] %v839
  %904 = vst [vmem:[#allocation2 + $0x1a0] sm:$0xff] %v840
  %905 = vst [vmem:[#allocation2 + $0x1a8] sm:$0xff] %v841
  %906 = vst [vmem:[#allocation2 + $0x1b0] sm:$0xff] %v842
  %907 = vst [vmem:[#allocation2 + $0x1b8] sm:$0xff] %v843
  %908 = vst [vmem:[#allocation2 + $0x1c0] sm:$0xff] %v844
  %909 = vst [vmem:[#allocation2 + $0x1c8] sm:$0xff] %v845
  %910 = vst [vmem:[#allocation2 + $0x1d0] sm:$0xff] %v846
  %911 = vst [vmem:[#allocation2 + $0x1d8] sm:$0xff] %v847
  %912 = vst [vmem:[#allocation2 + $0x1e0] sm:$0xff] %v848
  %913 = vst [vmem:[#allocation2 + $0x1e8] sm:$0xff] %v849
  %914 = vst [vmem:[#allocation2 + $0x1f0] sm:$0xff] %v850
  %915 = vst [vmem:[#allocation2 + $0x1f8] sm:$0xff] %v851
  // Predicated region
  $region14: #{ck_forward.2} parent=0 // pred_check
    %p916 = pneg %p14
  $region15: #{ck_forward.2} parent=0 // pred_check_branch
    %918 = sbr.rel (%p916) target = $region17
  $region16: #{ck_forward.2} parent=0 // pred_region
    %v919 = vld [vmem:[#allocation2] sm:$0xff]
    %v920 = vld [vmem:[#allocation2 + $0x8] sm:$0xff]
    %v921 = vld [vmem:[#allocation2 + $0x10] sm:$0xff]
    %v922 = vld [vmem:[#allocation2 + $0x18] sm:$0xff]
    %v923 = vld [vmem:[#allocation2 + $0x20] sm:$0xff]
    %v924 = vld [vmem:[#allocation2 + $0x28] sm:$0xff]
    %v925 = vld [vmem:[#allocation2 + $0x30] sm:$0xff]
    %v926 = vld [vmem:[#allocation2 + $0x38] sm:$0xff]
    %v927 = vld [vmem:[#allocation2 + $0x40] sm:$0xff]
    %v928 = vld [vmem:[#allocation2 + $0x48] sm:$0xff]
    %v929 = vld [vmem:[#allocation2 + $0x50] sm:$0xff]
    %v930 = vld [vmem:[#allocation2 + $0x58] sm:$0xff]
    %v931 = vld [vmem:[#allocation2 + $0x60] sm:$0xff]
    %v932 = vld [vmem:[#allocation2 + $0x68] sm:$0xff]
    %v933 = vld [vmem:[#allocation2 + $0x70] sm:$0xff]
    %v934 = vld [vmem:[#allocation2 + $0x78] sm:$0xff]
    %v935 = vld [vmem:[#allocation2 + $0x80] sm:$0xff]
    %v936 = vld [vmem:[#allocation2 + $0x88] sm:$0xff]
    %v937 = vld [vmem:[#allocation2 + $0x90] sm:$0xff]
    %v938 = vld [vmem:[#allocation2 + $0x98] sm:$0xff]
    %v939 = vld [vmem:[#allocation2 + $0xa0] sm:$0xff]
    %v940 = vld [vmem:[#allocation2 + $0xa8] sm:$0xff]
    %v941 = vld [vmem:[#allocation2 + $0xb0] sm:$0xff]
    %v942 = vld [vmem:[#allocation2 + $0xb8] sm:$0xff]
    %v943 = vld [vmem:[#allocation2 + $0xc0] sm:$0xff]
    %v944 = vld [vmem:[#allocation2 + $0xc8] sm:$0xff]
    %v945 = vld [vmem:[#allocation2 + $0xd0] sm:$0xff]
    %v946 = vld [vmem:[#allocation2 + $0xd8] sm:$0xff]
    %v947 = vld [vmem:[#allocation2 + $0xe0] sm:$0xff]
    %v948 = vld [vmem:[#allocation2 + $0xe8] sm:$0xff]
    %v949 = vld [vmem:[#allocation2 + $0xf0] sm:$0xff]
    %v950 = vld [vmem:[#allocation2 + $0xf8] sm:$0xff]
    %v951 = vld [vmem:[#allocation2 + $0x100] sm:$0xff]
    %v952 = vld [vmem:[#allocation2 + $0x108] sm:$0xff]
    %v953 = vld [vmem:[#allocation2 + $0x110] sm:$0xff]
    %v954 = vld [vmem:[#allocation2 + $0x118] sm:$0xff]
    %v955 = vld [vmem:[#allocation2 + $0x120] sm:$0xff]
    %v956 = vld [vmem:[#allocation2 + $0x128] sm:$0xff]
    %v957 = vld [vmem:[#allocation2 + $0x130] sm:$0xff]
    %v958 = vld [vmem:[#allocation2 + $0x138] sm:$0xff]
    %v959 = vld [vmem:[#allocation2 + $0x140] sm:$0xff]
    %v960 = vld [vmem:[#allocation2 + $0x148] sm:$0xff]
    %v961 = vld [vmem:[#allocation2 + $0x150] sm:$0xff]
    %v962 = vld [vmem:[#allocation2 + $0x158] sm:$0xff]
    %v963 = vld [vmem:[#allocation2 + $0x160] sm:$0xff]
    %v964 = vld [vmem:[#allocation2 + $0x168] sm:$0xff]
    %v965 = vld [vmem:[#allocation2 + $0x170] sm:$0xff]
    %v966 = vld [vmem:[#allocation2 + $0x178] sm:$0xff]
    %v967 = vld [vmem:[#allocation2 + $0x180] sm:$0xff]
    %v968 = vld [vmem:[#allocation2 + $0x188] sm:$0xff]
    %v969 = vld [vmem:[#allocation2 + $0x190] sm:$0xff]
    %v970 = vld [vmem:[#allocation2 + $0x198] sm:$0xff]
    %v971 = vld [vmem:[#allocation2 + $0x1a0] sm:$0xff]
    %v972 = vld [vmem:[#allocation2 + $0x1a8] sm:$0xff]
    %v973 = vld [vmem:[#allocation2 + $0x1b0] sm:$0xff]
    %v974 = vld [vmem:[#allocation2 + $0x1b8] sm:$0xff]
    %v975 = vld [vmem:[#allocation2 + $0x1c0] sm:$0xff]
    %v976 = vld [vmem:[#allocation2 + $0x1c8] sm:$0xff]
    %v977 = vld [vmem:[#allocation2 + $0x1d0] sm:$0xff]
    %v978 = vld [vmem:[#allocation2 + $0x1d8] sm:$0xff]
    %v979 = vld [vmem:[#allocation2 + $0x1e0] sm:$0xff]
    %v980 = vld [vmem:[#allocation2 + $0x1e8] sm:$0xff]
    %v981 = vld [vmem:[#allocation2 + $0x1f0] sm:$0xff]
    %v982 = vld [vmem:[#allocation2 + $0x1f8] sm:$0xff]
    %v983 = vadd.f32 %v919, %v920
    %v984 = vadd.f32 %v983, %v921
    %v985 = vadd.f32 %v984, %v922
    %v986 = vadd.f32 %v985, %v923
    %v987 = vadd.f32 %v986, %v924
    %v988 = vadd.f32 %v987, %v925
    %v989 = vadd.f32 %v988, %v926
    %v990 = vadd.f32 %v989, %v927
    %v991 = vadd.f32 %v990, %v928
    %v992 = vadd.f32 %v991, %v929
    %v993 = vadd.f32 %v992, %v930
    %v994 = vadd.f32 %v993, %v931
    %v995 = vadd.f32 %v994, %v932
    %v996 = vadd.f32 %v995, %v933
    %v997 = vadd.f32 %v996, %v934
    %v998 = vadd.f32 %v997, %v935
    %v999 = vadd.f32 %v998, %v936
    %v1000 = vadd.f32 %v999, %v937
    %v1001 = vadd.f32 %v1000, %v938
    %v1002 = vadd.f32 %v1001, %v939
    %v1003 = vadd.f32 %v1002, %v940
    %v1004 = vadd.f32 %v1003, %v941
    %v1005 = vadd.f32 %v1004, %v942
    %v1006 = vadd.f32 %v1005, %v943
    %v1007 = vadd.f32 %v1006, %v944
    %v1008 = vadd.f32 %v1007, %v945
    %v1009 = vadd.f32 %v1008, %v946
    %v1010 = vadd.f32 %v1009, %v947
    %v1011 = vadd.f32 %v1010, %v948
    %v1012 = vadd.f32 %v1011, %v949
    %v1013 = vadd.f32 %v1012, %v950
    %v1014 = vadd.f32 %v1013, %v951
    %v1015 = vadd.f32 %v1014, %v952
    %v1016 = vadd.f32 %v1015, %v953
    %v1017 = vadd.f32 %v1016, %v954
    %v1018 = vadd.f32 %v1017, %v955
    %v1019 = vadd.f32 %v1018, %v956
    %v1020 = vadd.f32 %v1019, %v957
    %v1021 = vadd.f32 %v1020, %v958
    %v1022 = vadd.f32 %v1021, %v959
    %v1023 = vadd.f32 %v1022, %v960
    %v1024 = vadd.f32 %v1023, %v961
    %v1025 = vadd.f32 %v1024, %v962
    %v1026 = vadd.f32 %v1025, %v963
    %v1027 = vadd.f32 %v1026, %v964
    %v1028 = vadd.f32 %v1027, %v965
    %v1029 = vadd.f32 %v1028, %v966
    %v1030 = vadd.f32 %v1029, %v967
    %v1031 = vadd.f32 %v1030, %v968
    %v1032 = vadd.f32 %v1031, %v969
    %v1033 = vadd.f32 %v1032, %v970
    %v1034 = vadd.f32 %v1033, %v971
    %v1035 = vadd.f32 %v1034, %v972
    %v1036 = vadd.f32 %v1035, %v973
    %v1037 = vadd.f32 %v1036, %v974
    %v1038 = vadd.f32 %v1037, %v975
    %v1039 = vadd.f32 %v1038, %v976
    %v1040 = vadd.f32 %v1039, %v977
    %v1041 = vadd.f32 %v1040, %v978
    %v1042 = vadd.f32 %v1041, %v979
    %v1043 = vadd.f32 %v1042, %v980
    %v1044 = vadd.f32 %v1043, %v981
    %v1045 = vadd.f32 %v1044, %v982
    %v1046 = vrot.slane %v1045, 4
    %v1047 = vadd.f32 %v1045, %v1046
    %v1048 = vrot.slane %v1047, 2
    %v1049 = vadd.f32 %v1047, %v1048
    %v1050 = vrot.slane %v1049, 1
    %v1051 = vadd.f32 %v1049, %v1050
    %v1052 = vmul.f32 %v919, %v919
    %v1053 = vmul.f32 %v920, %v920
    %v1054 = vmul.f32 %v921, %v921
    %v1055 = vmul.f32 %v922, %v922
    %v1056 = vmul.f32 %v923, %v923
    %v1057 = vmul.f32 %v924, %v924
    %v1058 = vmul.f32 %v925, %v925
    %v1059 = vmul.f32 %v926, %v926
    %v1060 = vmul.f32 %v927, %v927
    %v1061 = vmul.f32 %v928, %v928
    %v1062 = vmul.f32 %v929, %v929
    %v1063 = vmul.f32 %v930, %v930
    %v1064 = vmul.f32 %v931, %v931
    %v1065 = vmul.f32 %v932, %v932
    %v1066 = vmul.f32 %v933, %v933
    %v1067 = vmul.f32 %v934, %v934
    %v1068 = vmul.f32 %v935, %v935
    %v1069 = vmul.f32 %v936, %v936
    %v1070 = vmul.f32 %v937, %v937
    %v1071 = vmul.f32 %v938, %v938
    %v1072 = vmul.f32 %v939, %v939
    %v1073 = vmul.f32 %v940, %v940
    %v1074 = vmul.f32 %v941, %v941
    %v1075 = vmul.f32 %v942, %v942
    %v1076 = vmul.f32 %v943, %v943
    %v1077 = vmul.f32 %v944, %v944
    %v1078 = vmul.f32 %v945, %v945
    %v1079 = vmul.f32 %v946, %v946
    %v1080 = vmul.f32 %v947, %v947
    %v1081 = vmul.f32 %v948, %v948
    %v1082 = vmul.f32 %v949, %v949
    %v1083 = vmul.f32 %v950, %v950
    %v1084 = vmul.f32 %v951, %v951
    %v1085 = vmul.f32 %v952, %v952
    %v1086 = vmul.f32 %v953, %v953
    %v1087 = vmul.f32 %v954, %v954
    %v1088 = vmul.f32 %v955, %v955
    %v1089 = vmul.f32 %v956, %v956
    %v1090 = vmul.f32 %v957, %v957
    %v1091 = vmul.f32 %v958, %v958
    %v1092 = vmul.f32 %v959, %v959
    %v1093 = vmul.f32 %v960, %v960
    %v1094 = vmul.f32 %v961, %v961
    %v1095 = vmul.f32 %v962, %v962
    %v1096 = vmul.f32 %v963, %v963
    %v1097 = vmul.f32 %v964, %v964
    %v1098 = vmul.f32 %v965, %v965
    %v1099 = vmul.f32 %v966, %v966
    %v1100 = vmul.f32 %v967, %v967
    %v1101 = vmul.f32 %v968, %v968
    %v1102 = vmul.f32 %v969, %v969
    %v1103 = vmul.f32 %v970, %v970
    %v1104 = vmul.f32 %v971, %v971
    %v1105 = vmul.f32 %v972, %v972
    %v1106 = vmul.f32 %v973, %v973
    %v1107 = vmul.f32 %v974, %v974
    %v1108 = vmul.f32 %v975, %v975
    %v1109 = vmul.f32 %v976, %v976
    %v1110 = vmul.f32 %v977, %v977
    %v1111 = vmul.f32 %v978, %v978
    %v1112 = vmul.f32 %v979, %v979
    %v1113 = vmul.f32 %v980, %v980
    %v1114 = vmul.f32 %v981, %v981
    %v1115 = vmul.f32 %v982, %v982
    %v1116 = vadd.f32 %v1052, %v1053
    %v1117 = vadd.f32 %v1116, %v1054
    %v1118 = vadd.f32 %v1117, %v1055
    %v1119 = vadd.f32 %v1118, %v1056
    %v1120 = vadd.f32 %v1119, %v1057
    %v1121 = vadd.f32 %v1120, %v1058
    %v1122 = vadd.f32 %v1121, %v1059
    %v1123 = vadd.f32 %v1122, %v1060
    %v1124 = vadd.f32 %v1123, %v1061
    %v1125 = vadd.f32 %v1124, %v1062
    %v1126 = vadd.f32 %v1125, %v1063
    %v1127 = vadd.f32 %v1126, %v1064
    %v1128 = vadd.f32 %v1127, %v1065
    %v1129 = vadd.f32 %v1128, %v1066
    %v1130 = vadd.f32 %v1129, %v1067
    %v1131 = vadd.f32 %v1130, %v1068
    %v1132 = vadd.f32 %v1131, %v1069
    %v1133 = vadd.f32 %v1132, %v1070
    %v1134 = vadd.f32 %v1133, %v1071
    %v1135 = vadd.f32 %v1134, %v1072
    %v1136 = vadd.f32 %v1135, %v1073
    %v1137 = vadd.f32 %v1136, %v1074
    %v1138 = vadd.f32 %v1137, %v1075
    %v1139 = vadd.f32 %v1138, %v1076
    %v1140 = vadd.f32 %v1139, %v1077
    %v1141 = vadd.f32 %v1140, %v1078
    %v1142 = vadd.f32 %v1141, %v1079
    %v1143 = vadd.f32 %v1142, %v1080
    %v1144 = vadd.f32 %v1143, %v1081
    %v1145 = vadd.f32 %v1144, %v1082
    %v1146 = vadd.f32 %v1145, %v1083
    %v1147 = vadd.f32 %v1146, %v1084
    %v1148 = vadd.f32 %v1147, %v1085
    %v1149 = vadd.f32 %v1148, %v1086
    %v1150 = vadd.f32 %v1149, %v1087
    %v1151 = vadd.f32 %v1150, %v1088
    %v1152 = vadd.f32 %v1151, %v1089
    %v1153 = vadd.f32 %v1152, %v1090
    %v1154 = vadd.f32 %v1153, %v1091
    %v1155 = vadd.f32 %v1154, %v1092
    %v1156 = vadd.f32 %v1155, %v1093
    %v1157 = vadd.f32 %v1156, %v1094
    %v1158 = vadd.f32 %v1157, %v1095
    %v1159 = vadd.f32 %v1158, %v1096
    %v1160 = vadd.f32 %v1159, %v1097
    %v1161 = vadd.f32 %v1160, %v1098
    %v1162 = vadd.f32 %v1161, %v1099
    %v1163 = vadd.f32 %v1162, %v1100
    %v1164 = vadd.f32 %v1163, %v1101
    %v1165 = vadd.f32 %v1164, %v1102
    %v1166 = vadd.f32 %v1165, %v1103
    %v1167 = vadd.f32 %v1166, %v1104
    %v1168 = vadd.f32 %v1167, %v1105
    %v1169 = vadd.f32 %v1168, %v1106
    %v1170 = vadd.f32 %v1169, %v1107
    %v1171 = vadd.f32 %v1170, %v1108
    %v1172 = vadd.f32 %v1171, %v1109
    %v1173 = vadd.f32 %v1172, %v1110
    %v1174 = vadd.f32 %v1173, %v1111
    %v1175 = vadd.f32 %v1174, %v1112
    %v1176 = vadd.f32 %v1175, %v1113
    %v1177 = vadd.f32 %v1176, %v1114
    %v1178 = vadd.f32 %v1177, %v1115
    %v1179 = vrot.slane %v1178, 4
    %v1180 = vadd.f32 %v1178, %v1179
    %v1181 = vrot.slane %v1180, 2
    %v1182 = vadd.f32 %v1180, %v1181
    %v1183 = vrot.slane %v1182, 1
    %v1184 = vadd.f32 %v1182, %v1183
    %1185 = vst [vmem:[%s2] sm:$0xff] %v1051
    %1186 = vst [vmem:[%s3] sm:$0xff] %v1184
  $region17: #{ck_forward.2} parent=0 // pred_fallthru
    _
  // Predicated region
  $region18: #{ck_forward.2} parent=0 // pred_check
    _
  $region19: #{ck_forward.2} parent=0 // pred_check_branch
    %1188 = sbr.rel (0) target = $region21
  $region20: #{ck_forward.2} parent=0 // pred_region
    _
  $region21: #{ck_forward.2} parent=0 // pred_fallthru
    _
  // Predicated region
  $region22: #{ck_forward.2} parent=0 // pred_check
    _
  $region23: #{ck_forward.2} parent=0 // pred_check_branch
    %1190 = sbr.rel (0) target = $region25
  $region24: #{ck_forward.2} parent=0 // pred_region
    _
  $region25: #{ck_forward.2} parent=0 // pred_fallthru
    _
  // Predicated region
  $region26: #{ck_forward.2} parent=0 // pred_check
    _
  $region27: #{ck_forward.2} parent=0 // pred_check_branch
    %1192 = sbr.rel (0) target = $region29
  $region28: #{ck_forward.2} parent=0 // pred_region
    _
  $region29: #{ck_forward.2} parent=0 // pred_fallthru
    _
  // Predicated region
  $region30: #{ck_forward.2} parent=0 // pred_check
    _
  $region31: #{ck_forward.2} parent=0 // pred_check_branch
    %1194 = sbr.rel (0) target = $region33
  $region32: #{ck_forward.2} parent=0 // pred_region
    _
  $region33: #{ck_forward.2} parent=0 // pred_fallthru
    _

// kernel: ck_forward.3
$region0: #{ck_forward.3}
  #allocation0 [shape = 'u32[]', space=smem, size = 0x4, offset = 0x4, fixed_abs, tag = 'smem constant byte address 0x4 - core index']
  #allocation1 [shape = 'u32[144,128]{1,0:T(1,128)}', space=vmem, size = 0x12000, scoped, tag = 'internal scratch']
  #allocation2 [shape = 'f32[512,128]{1,0:T(8,128)}', space=vmem, size = 0x40000, scoped, tag = 'scratch operand']
  %s0 = inlined_call_operand.vmem [shape: bf16[512,64], index: 0, kind: input, shape index: {}]
  %s1 = inlined_call_operand.vmem [shape: bf16[64,128], index: 1, kind: input, shape index: {}]
  %s2 = inlined_call_operand.vmem [shape: f32[1,128], index: 2, kind: input, shape index: {}]
  %s3 = inlined_call_operand.vmem [shape: f32[1,128], index: 3, kind: input, shape index: {}]
  %s4 = inlined_call_operand.vmem [shape: f32[512,8], index: 4, kind: output, shape index: {}]
  %s5 = sld [smem:[#allocation0]]
  $region34: #{ck_forward.3} parent=0
    _
  %s7 = ssub.s32 1, %s5
  %s8 = scalar_select 0, %s7, %s5
  // Predicated region
  $region2: #{ck_forward.3} parent=0 // pred_check
    _
  $region3: #{ck_forward.3} parent=0 // pred_check_branch
    %10 = sbr.rel (0) target = $region5
  $region4: #{ck_forward.3} parent=0 // pred_region
    _
  $region5: #{ck_forward.3} parent=0 // pred_fallthru
    _
  // Predicated region
  $region6: #{ck_forward.3} parent=0 // pred_check
    _
  $region7: #{ck_forward.3} parent=0 // pred_check_branch
    %12 = sbr.rel (0) target = $region9
  $region8: #{ck_forward.3} parent=0 // pred_region
    _
  $region9: #{ck_forward.3} parent=0 // pred_fallthru
    _
  // Predicated region
  $region10: #{ck_forward.3} parent=0 // pred_check
    _
  $region11: #{ck_forward.3} parent=0 // pred_check_branch
    %14 = sbr.rel (0) target = $region13
  $region12: #{ck_forward.3} parent=0 // pred_region
    _
  $region13: #{ck_forward.3} parent=0 // pred_fallthru
    _
  // Predicated region
  $region14: #{ck_forward.3} parent=0 // pred_check
    _
  $region15: #{ck_forward.3} parent=0 // pred_check_branch
    %16 = sbr.rel (0) target = $region17
  $region16: #{ck_forward.3} parent=0 // pred_region
    _
  $region17: #{ck_forward.3} parent=0 // pred_fallthru
    _
  %p18 = scmp.eq.s32.totalorder 0, 0
  // Predicated region
  $region18: #{ck_forward.3} parent=0 // pred_check
    %p19 = pneg %p18
  $region19: #{ck_forward.3} parent=0 // pred_check_branch
    %21 = sbr.rel (%p19) target = $region21
  $region20: #{ck_forward.3} parent=0 // pred_region
    %22 = vst [vmem:[#allocation2] sm:$0xff] 0.0
    %23 = vst [vmem:[#allocation2 + $0x8] sm:$0xff] 0.0
    %24 = vst [vmem:[#allocation2 + $0x10] sm:$0xff] 0.0
    %25 = vst [vmem:[#allocation2 + $0x18] sm:$0xff] 0.0
    %26 = vst [vmem:[#allocation2 + $0x20] sm:$0xff] 0.0
    %27 = vst [vmem:[#allocation2 + $0x28] sm:$0xff] 0.0
    %28 = vst [vmem:[#allocation2 + $0x30] sm:$0xff] 0.0
    %29 = vst [vmem:[#allocation2 + $0x38] sm:$0xff] 0.0
    %30 = vst [vmem:[#allocation2 + $0x40] sm:$0xff] 0.0
    %31 = vst [vmem:[#allocation2 + $0x48] sm:$0xff] 0.0
    %32 = vst [vmem:[#allocation2 + $0x50] sm:$0xff] 0.0
    %33 = vst [vmem:[#allocation2 + $0x58] sm:$0xff] 0.0
    %34 = vst [vmem:[#allocation2 + $0x60] sm:$0xff] 0.0
    %35 = vst [vmem:[#allocation2 + $0x68] sm:$0xff] 0.0
    %36 = vst [vmem:[#allocation2 + $0x70] sm:$0xff] 0.0
    %37 = vst [vmem:[#allocation2 + $0x78] sm:$0xff] 0.0
    %38 = vst [vmem:[#allocation2 + $0x80] sm:$0xff] 0.0
    %39 = vst [vmem:[#allocation2 + $0x88] sm:$0xff] 0.0
    %40 = vst [vmem:[#allocation2 + $0x90] sm:$0xff] 0.0
    %41 = vst [vmem:[#allocation2 + $0x98] sm:$0xff] 0.0
    %42 = vst [vmem:[#allocation2 + $0xa0] sm:$0xff] 0.0
    %43 = vst [vmem:[#allocation2 + $0xa8] sm:$0xff] 0.0
    %44 = vst [vmem:[#allocation2 + $0xb0] sm:$0xff] 0.0
    %45 = vst [vmem:[#allocation2 + $0xb8] sm:$0xff] 0.0
    %46 = vst [vmem:[#allocation2 + $0xc0] sm:$0xff] 0.0
    %47 = vst [vmem:[#allocation2 + $0xc8] sm:$0xff] 0.0
    %48 = vst [vmem:[#allocation2 + $0xd0] sm:$0xff] 0.0
    %49 = vst [vmem:[#allocation2 + $0xd8] sm:$0xff] 0.0
    %50 = vst [vmem:[#allocation2 + $0xe0] sm:$0xff] 0.0
    %51 = vst [vmem:[#allocation2 + $0xe8] sm:$0xff] 0.0
    %52 = vst [vmem:[#allocation2 + $0xf0] sm:$0xff] 0.0
    %53 = vst [vmem:[#allocation2 + $0xf8] sm:$0xff] 0.0
    %54 = vst [vmem:[#allocation2 + $0x100] sm:$0xff] 0.0
    %55 = vst [vmem:[#allocation2 + $0x108] sm:$0xff] 0.0
    %56 = vst [vmem:[#allocation2 + $0x110] sm:$0xff] 0.0
    %57 = vst [vmem:[#allocation2 + $0x118] sm:$0xff] 0.0
    %58 = vst [vmem:[#allocation2 + $0x120] sm:$0xff] 0.0
    %59 = vst [vmem:[#allocation2 + $0x128] sm:$0xff] 0.0
    %60 = vst [vmem:[#allocation2 + $0x130] sm:$0xff] 0.0
    %61 = vst [vmem:[#allocation2 + $0x138] sm:$0xff] 0.0
    %62 = vst [vmem:[#allocation2 + $0x140] sm:$0xff] 0.0
    %63 = vst [vmem:[#allocation2 + $0x148] sm:$0xff] 0.0
    %64 = vst [vmem:[#allocation2 + $0x150] sm:$0xff] 0.0
    %65 = vst [vmem:[#allocation2 + $0x158] sm:$0xff] 0.0
    %66 = vst [vmem:[#allocation2 + $0x160] sm:$0xff] 0.0
    %67 = vst [vmem:[#allocation2 + $0x168] sm:$0xff] 0.0
    %68 = vst [vmem:[#allocation2 + $0x170] sm:$0xff] 0.0
    %69 = vst [vmem:[#allocation2 + $0x178] sm:$0xff] 0.0
    %70 = vst [vmem:[#allocation2 + $0x180] sm:$0xff] 0.0
    %71 = vst [vmem:[#allocation2 + $0x188] sm:$0xff] 0.0
    %72 = vst [vmem:[#allocation2 + $0x190] sm:$0xff] 0.0
    %73 = vst [vmem:[#allocation2 + $0x198] sm:$0xff] 0.0
    %74 = vst [vmem:[#allocation2 + $0x1a0] sm:$0xff] 0.0
    %75 = vst [vmem:[#allocation2 + $0x1a8] sm:$0xff] 0.0
    %76 = vst [vmem:[#allocation2 + $0x1b0] sm:$0xff] 0.0
    %77 = vst [vmem:[#allocation2 + $0x1b8] sm:$0xff] 0.0
    %78 = vst [vmem:[#allocation2 + $0x1c0] sm:$0xff] 0.0
    %79 = vst [vmem:[#allocation2 + $0x1c8] sm:$0xff] 0.0
    %80 = vst [vmem:[#allocation2 + $0x1d0] sm:$0xff] 0.0
    %81 = vst [vmem:[#allocation2 + $0x1d8] sm:$0xff] 0.0
    %82 = vst [vmem:[#allocation2 + $0x1e0] sm:$0xff] 0.0
    %83 = vst [vmem:[#allocation2 + $0x1e8] sm:$0xff] 0.0
    %84 = vst [vmem:[#allocation2 + $0x1f0] sm:$0xff] 0.0
    %85 = vst [vmem:[#allocation2 + $0x1f8] sm:$0xff] 0.0
  $region21: #{ck_forward.3} parent=0 // pred_fallthru
    _
  %v86 = vld [vmem:[#allocation2] sm:$0xff]
  %v87 = vld [vmem:[#allocation2 + $0x8] sm:$0xff]
  %v88 = vld [vmem:[#allocation2 + $0x10] sm:$0xff]
  %v89 = vld [vmem:[#allocation2 + $0x18] sm:$0xff]
  %v90 = vld [vmem:[#allocation2 + $0x20] sm:$0xff]
  %v91 = vld [vmem:[#allocation2 + $0x28] sm:$0xff]
  %v92 = vld [vmem:[#allocation2 + $0x30] sm:$0xff]
  %v93 = vld [vmem:[#allocation2 + $0x38] sm:$0xff]
  %v94 = vld [vmem:[#allocation2 + $0x40] sm:$0xff]
  %v95 = vld [vmem:[#allocation2 + $0x48] sm:$0xff]
  %v96 = vld [vmem:[#allocation2 + $0x50] sm:$0xff]
  %v97 = vld [vmem:[#allocation2 + $0x58] sm:$0xff]
  %v98 = vld [vmem:[#allocation2 + $0x60] sm:$0xff]
  %v99 = vld [vmem:[#allocation2 + $0x68] sm:$0xff]
  %v100 = vld [vmem:[#allocation2 + $0x70] sm:$0xff]
  %v101 = vld [vmem:[#allocation2 + $0x78] sm:$0xff]
  %v102 = vld [vmem:[#allocation2 + $0x80] sm:$0xff]
  %v103 = vld [vmem:[#allocation2 + $0x88] sm:$0xff]
  %v104 = vld [vmem:[#allocation2 + $0x90] sm:$0xff]
  %v105 = vld [vmem:[#allocation2 + $0x98] sm:$0xff]
  %v106 = vld [vmem:[#allocation2 + $0xa0] sm:$0xff]
  %v107 = vld [vmem:[#allocation2 + $0xa8] sm:$0xff]
  %v108 = vld [vmem:[#allocation2 + $0xb0] sm:$0xff]
  %v109 = vld [vmem:[#allocation2 + $0xb8] sm:$0xff]
  %v110 = vld [vmem:[#allocation2 + $0xc0] sm:$0xff]
  %v111 = vld [vmem:[#allocation2 + $0xc8] sm:$0xff]
  %v112 = vld [vmem:[#allocation2 + $0xd0] sm:$0xff]
  %v113 = vld [vmem:[#allocation2 + $0xd8] sm:$0xff]
  %v114 = vld [vmem:[#allocation2 + $0xe0] sm:$0xff]
  %v115 = vld [vmem:[#allocation2 + $0xe8] sm:$0xff]
  %v116 = vld [vmem:[#allocation2 + $0xf0] sm:$0xff]
  %v117 = vld [vmem:[#allocation2 + $0xf8] sm:$0xff]
  %v118 = vld [vmem:[#allocation2 + $0x100] sm:$0xff]
  %v119 = vld [vmem:[#allocation2 + $0x108] sm:$0xff]
  %v120 = vld [vmem:[#allocation2 + $0x110] sm:$0xff]
  %v121 = vld [vmem:[#allocation2 + $0x118] sm:$0xff]
  %v122 = vld [vmem:[#allocation2 + $0x120] sm:$0xff]
  %v123 = vld [vmem:[#allocation2 + $0x128] sm:$0xff]
  %v124 = vld [vmem:[#allocation2 + $0x130] sm:$0xff]
  %v125 = vld [vmem:[#allocation2 + $0x138] sm:$0xff]
  %v126 = vld [vmem:[#allocation2 + $0x140] sm:$0xff]
  %v127 = vld [vmem:[#allocation2 + $0x148] sm:$0xff]
  %v128 = vld [vmem:[#allocation2 + $0x150] sm:$0xff]
  %v129 = vld [vmem:[#allocation2 + $0x158] sm:$0xff]
  %v130 = vld [vmem:[#allocation2 + $0x160] sm:$0xff]
  %v131 = vld [vmem:[#allocation2 + $0x168] sm:$0xff]
  %v132 = vld [vmem:[#allocation2 + $0x170] sm:$0xff]
  %v133 = vld [vmem:[#allocation2 + $0x178] sm:$0xff]
  %v134 = vld [vmem:[#allocation2 + $0x180] sm:$0xff]
  %v135 = vld [vmem:[#allocation2 + $0x188] sm:$0xff]
  %v136 = vld [vmem:[#allocation2 + $0x190] sm:$0xff]
  %v137 = vld [vmem:[#allocation2 + $0x198] sm:$0xff]
  %v138 = vld [vmem:[#allocation2 + $0x1a0] sm:$0xff]
  %v139 = vld [vmem:[#allocation2 + $0x1a8] sm:$0xff]
  %v140 = vld [vmem:[#allocation2 + $0x1b0] sm:$0xff]
  %v141 = vld [vmem:[#allocation2 + $0x1b8] sm:$0xff]
  %v142 = vld [vmem:[#allocation2 + $0x1c0] sm:$0xff]
  %v143 = vld [vmem:[#allocation2 + $0x1c8] sm:$0xff]
  %v144 = vld [vmem:[#allocation2 + $0x1d0] sm:$0xff]
  %v145 = vld [vmem:[#allocation2 + $0x1d8] sm:$0xff]
  %v146 = vld [vmem:[#allocation2 + $0x1e0] sm:$0xff]
  %v147 = vld [vmem:[#allocation2 + $0x1e8] sm:$0xff]
  %v148 = vld [vmem:[#allocation2 + $0x1f0] sm:$0xff]
  %v149 = vld [vmem:[#allocation2 + $0x1f8] sm:$0xff]
  %v150 = vld [vmem:[%s0] sm:$0xf]
  %v151 = vld [vmem:[%s0 + $0x4] sm:$0xf]
  %v152 = vld [vmem:[%s0 + $0x8] sm:$0xf]
  %v153 = vld [vmem:[%s0 + $0xc] sm:$0xf]
  %v154 = vld [vmem:[%s0 + $0x10] sm:$0xf]
  %v155 = vld [vmem:[%s0 + $0x14] sm:$0xf]
  %v156 = vld [vmem:[%s0 + $0x18] sm:$0xf]
  %v157 = vld [vmem:[%s0 + $0x1c] sm:$0xf]
  %v158 = vld [vmem:[%s0 + $0x20] sm:$0xf]
  %v159 = vld [vmem:[%s0 + $0x24] sm:$0xf]
  %v160 = vld [vmem:[%s0 + $0x28] sm:$0xf]
  %v161 = vld [vmem:[%s0 + $0x2c] sm:$0xf]
  %v162 = vld [vmem:[%s0 + $0x30] sm:$0xf]
  %v163 = vld [vmem:[%s0 + $0x34] sm:$0xf]
  %v164 = vld [vmem:[%s0 + $0x38] sm:$0xf]
  %v165 = vld [vmem:[%s0 + $0x3c] sm:$0xf]
  %v166 = vld [vmem:[%s0 + $0x40] sm:$0xf]
  %v167 = vld [vmem:[%s0 + $0x44] sm:$0xf]
  %v168 = vld [vmem:[%s0 + $0x48] sm:$0xf]
  %v169 = vld [vmem:[%s0 + $0x4c] sm:$0xf]
  %v170 = vld [vmem:[%s0 + $0x50] sm:$0xf]
  %v171 = vld [vmem:[%s0 + $0x54] sm:$0xf]
  %v172 = vld [vmem:[%s0 + $0x58] sm:$0xf]
  %v173 = vld [vmem:[%s0 + $0x5c] sm:$0xf]
  %v174 = vld [vmem:[%s0 + $0x60] sm:$0xf]
  %v175 = vld [vmem:[%s0 + $0x64] sm:$0xf]
  %v176 = vld [vmem:[%s0 + $0x68] sm:$0xf]
  %v177 = vld [vmem:[%s0 + $0x6c] sm:$0xf]
  %v178 = vld [vmem:[%s0 + $0x70] sm:$0xf]
  %v179 = vld [vmem:[%s0 + $0x74] sm:$0xf]
  %v180 = vld [vmem:[%s0 + $0x78] sm:$0xf]
  %v181 = vld [vmem:[%s0 + $0x7c] sm:$0xf]
  %v182 = vld [vmem:[%s0 + $0x80] sm:$0xf]
  %v183 = vld [vmem:[%s0 + $0x84] sm:$0xf]
  %v184 = vld [vmem:[%s0 + $0x88] sm:$0xf]
  %v185 = vld [vmem:[%s0 + $0x8c] sm:$0xf]
  %v186 = vld [vmem:[%s0 + $0x90] sm:$0xf]
  %v187 = vld [vmem:[%s0 + $0x94] sm:$0xf]
  %v188 = vld [vmem:[%s0 + $0x98] sm:$0xf]
  %v189 = vld [vmem:[%s0 + $0x9c] sm:$0xf]
  %v190 = vld [vmem:[%s0 + $0xa0] sm:$0xf]
  %v191 = vld [vmem:[%s0 + $0xa4] sm:$0xf]
  %v192 = vld [vmem:[%s0 + $0xa8] sm:$0xf]
  %v193 = vld [vmem:[%s0 + $0xac] sm:$0xf]
  %v194 = vld [vmem:[%s0 + $0xb0] sm:$0xf]
  %v195 = vld [vmem:[%s0 + $0xb4] sm:$0xf]
  %v196 = vld [vmem:[%s0 + $0xb8] sm:$0xf]
  %v197 = vld [vmem:[%s0 + $0xbc] sm:$0xf]
  %v198 = vld [vmem:[%s0 + $0xc0] sm:$0xf]
  %v199 = vld [vmem:[%s0 + $0xc4] sm:$0xf]
  %v200 = vld [vmem:[%s0 + $0xc8] sm:$0xf]
  %v201 = vld [vmem:[%s0 + $0xcc] sm:$0xf]
  %v202 = vld [vmem:[%s0 + $0xd0] sm:$0xf]
  %v203 = vld [vmem:[%s0 + $0xd4] sm:$0xf]
  %v204 = vld [vmem:[%s0 + $0xd8] sm:$0xf]
  %v205 = vld [vmem:[%s0 + $0xdc] sm:$0xf]
  %v206 = vld [vmem:[%s0 + $0xe0] sm:$0xf]
  %v207 = vld [vmem:[%s0 + $0xe4] sm:$0xf]
  %v208 = vld [vmem:[%s0 + $0xe8] sm:$0xf]
  %v209 = vld [vmem:[%s0 + $0xec] sm:$0xf]
  %v210 = vld [vmem:[%s0 + $0xf0] sm:$0xf]
  %v211 = vld [vmem:[%s0 + $0xf4] sm:$0xf]
  %v212 = vld [vmem:[%s0 + $0xf8] sm:$0xf]
  %v213 = vld [vmem:[%s0 + $0xfc] sm:$0xf]
  %v214 = vld [vmem:[%s1] sm:$0xf]
  %v215 = vld [vmem:[%s1 + $0x4] sm:$0xf]
  %v216 = vld [vmem:[%s1 + $0x8] sm:$0xf]
  %v217 = vld [vmem:[%s1 + $0xc] sm:$0xf]
  %v218 = vld [vmem:[%s1 + $0x10] sm:$0xf]
  %v219 = vld [vmem:[%s1 + $0x14] sm:$0xf]
  %v220 = vld [vmem:[%s1 + $0x18] sm:$0xf]
  %v221 = vld [vmem:[%s1 + $0x1c] sm:$0xf]
  %v286 = vunpack.c.l.b16 %v150
  %v287 = vunpack.c.l.b16 %v151
  %v288 = vunpack.c.l.b16 %v152
  %v289 = vunpack.c.l.b16 %v153
  %v290 = vunpack.c.l.b16 %v154
  %v291 = vunpack.c.l.b16 %v155
  %v292 = vunpack.c.l.b16 %v156
  %v293 = vunpack.c.l.b16 %v157
  %v294 = vunpack.c.l.b16 %v158
  %v295 = vunpack.c.l.b16 %v159
  %v296 = vunpack.c.l.b16 %v160
  %v297 = vunpack.c.l.b16 %v161
  %v298 = vunpack.c.l.b16 %v162
  %v299 = vunpack.c.l.b16 %v163
  %v300 = vunpack.c.l.b16 %v164
  %v301 = vunpack.c.l.b16 %v165
  %v302 = vunpack.c.l.b16 %v166
  %v303 = vunpack.c.l.b16 %v167
  %v304 = vunpack.c.l.b16 %v168
  %v305 = vunpack.c.l.b16 %v169
  %v306 = vunpack.c.l.b16 %v170
  %v307 = vunpack.c.l.b16 %v171
  %v308 = vunpack.c.l.b16 %v172
  %v309 = vunpack.c.l.b16 %v173
  %v310 = vunpack.c.l.b16 %v174
  %v311 = vunpack.c.l.b16 %v175
  %v312 = vunpack.c.l.b16 %v176
  %v313 = vunpack.c.l.b16 %v177
  %v314 = vunpack.c.l.b16 %v178
  %v315 = vunpack.c.l.b16 %v179
  %v316 = vunpack.c.l.b16 %v180
  %v317 = vunpack.c.l.b16 %v181
  %v318 = vunpack.c.l.b16 %v182
  %v319 = vunpack.c.l.b16 %v183
  %v320 = vunpack.c.l.b16 %v184
  %v321 = vunpack.c.l.b16 %v185
  %v322 = vunpack.c.l.b16 %v186
  %v323 = vunpack.c.l.b16 %v187
  %v324 = vunpack.c.l.b16 %v188
  %v325 = vunpack.c.l.b16 %v189
  %v326 = vunpack.c.l.b16 %v190
  %v327 = vunpack.c.l.b16 %v191
  %v328 = vunpack.c.l.b16 %v192
  %v329 = vunpack.c.l.b16 %v193
  %v330 = vunpack.c.l.b16 %v194
  %v331 = vunpack.c.l.b16 %v195
  %v332 = vunpack.c.l.b16 %v196
  %v333 = vunpack.c.l.b16 %v197
  %v334 = vunpack.c.l.b16 %v198
  %v335 = vunpack.c.l.b16 %v199
  %v336 = vunpack.c.l.b16 %v200
  %v337 = vunpack.c.l.b16 %v201
  %v338 = vunpack.c.l.b16 %v202
  %v339 = vunpack.c.l.b16 %v203
  %v340 = vunpack.c.l.b16 %v204
  %v341 = vunpack.c.l.b16 %v205
  %v342 = vunpack.c.l.b16 %v206
  %v343 = vunpack.c.l.b16 %v207
  %v344 = vunpack.c.l.b16 %v208
  %v345 = vunpack.c.l.b16 %v209
  %v346 = vunpack.c.l.b16 %v210
  %v347 = vunpack.c.l.b16 %v211
  %v348 = vunpack.c.l.b16 %v212
  %v349 = vunpack.c.l.b16 %v213
  %v350 = vpack.c.b16 %v287, %v286
  %v351 = vpack.c.b16 %v289, %v288
  %v352 = vpack.c.b16 %v291, %v290
  %v353 = vpack.c.b16 %v293, %v292
  %v354 = vpack.c.b16 %v295, %v294
  %v355 = vpack.c.b16 %v297, %v296
  %v356 = vpack.c.b16 %v299, %v298
  %v357 = vpack.c.b16 %v301, %v300
  %v358 = vpack.c.b16 %v303, %v302
  %v359 = vpack.c.b16 %v305, %v304
  %v360 = vpack.c.b16 %v307, %v306
  %v361 = vpack.c.b16 %v309, %v308
  %v362 = vpack.c.b16 %v311, %v310
  %v363 = vpack.c.b16 %v313, %v312
  %v364 = vpack.c.b16 %v315, %v314
  %v365 = vpack.c.b16 %v317, %v316
  %v366 = vpack.c.b16 %v319, %v318
  %v367 = vpack.c.b16 %v321, %v320
  %v368 = vpack.c.b16 %v323, %v322
  %v369 = vpack.c.b16 %v325, %v324
  %v370 = vpack.c.b16 %v327, %v326
  %v371 = vpack.c.b16 %v329, %v328
  %v372 = vpack.c.b16 %v331, %v330
  %v373 = vpack.c.b16 %v333, %v332
  %v374 = vpack.c.b16 %v335, %v334
  %v375 = vpack.c.b16 %v337, %v336
  %v376 = vpack.c.b16 %v339, %v338
  %v377 = vpack.c.b16 %v341, %v340
  %v378 = vpack.c.b16 %v343, %v342
  %v379 = vpack.c.b16 %v345, %v344
  %v380 = vpack.c.b16 %v347, %v346
  %v381 = vpack.c.b16 %v349, %v348
  %v390 = vunpack.c.l.b16 %v214
  %v391 = vunpack.c.l.b16 %v215
  %v392 = vunpack.c.l.b16 %v216
  %v393 = vunpack.c.l.b16 %v217
  %v394 = vunpack.c.l.b16 %v218
  %v395 = vunpack.c.l.b16 %v219
  %v396 = vunpack.c.l.b16 %v220
  %v397 = vunpack.c.l.b16 %v221
  %v398 = vpack.c.b16 %v391, %v390
  %v399 = vpack.c.b16 %v393, %v392
  %v400 = vpack.c.b16 %v395, %v394
  %v401 = vpack.c.b16 %v397, %v396
  %vm406 = vcmask 523264
  %v408 = vsel %vm406, %v350, 0
  %v411 = vsel %vm406, %v351, 0
  %v414 = vsel %vm406, %v352, 0
  %v417 = vsel %vm406, %v353, 0
  %v420 = vsel %vm406, %v354, 0
  %v423 = vsel %vm406, %v355, 0
  %v426 = vsel %vm406, %v356, 0
  %v429 = vsel %vm406, %v357, 0
  %v432 = vsel %vm406, %v358, 0
  %v435 = vsel %vm406, %v359, 0
  %v438 = vsel %vm406, %v360, 0
  %v441 = vsel %vm406, %v361, 0
  %v444 = vsel %vm406, %v362, 0
  %v447 = vsel %vm406, %v363, 0
  %v450 = vsel %vm406, %v364, 0
  %v453 = vsel %vm406, %v365, 0
  %v456 = vsel %vm406, %v366, 0
  %v459 = vsel %vm406, %v367, 0
  %v462 = vsel %vm406, %v368, 0
  %v465 = vsel %vm406, %v369, 0
  %v468 = vsel %vm406, %v370, 0
  %v471 = vsel %vm406, %v371, 0
  %v474 = vsel %vm406, %v372, 0
  %v477 = vsel %vm406, %v373, 0
  %v480 = vsel %vm406, %v374, 0
  %v483 = vsel %vm406, %v375, 0
  %v486 = vsel %vm406, %v376, 0
  %v489 = vsel %vm406, %v377, 0
  %v492 = vsel %vm406, %v378, 0
  %v495 = vsel %vm406, %v379, 0
  %v498 = vsel %vm406, %v380, 0
  %v501 = vsel %vm406, %v381, 0
  %503 = vmatprep.subr.bf16.mxu0 0
  %504 = vmatpush1.bf16.msra.mxu0 0
  %505 = vmatprep.subr.bf16.mxu0 0
  %506 = vmatpush1.bf16.msra.mxu0 0
  %507 = vmatprep.subr.bf16.mxu0 0
  %508 = vmatpush1.bf16.msra.mxu0 0
  %509 = vmatprep.subr.bf16.mxu0 0
  %510 = vmatpush1.bf16.msra.mxu0 0
  %511 = vmatprep.subr.bf16.mxu0 0
  %512 = vmatpush1.bf16.msra.mxu0 %v401
  %513 = vmatprep.subr.bf16.mxu0 0
  %514 = vmatpush1.bf16.msra.mxu0 %v400
  %515 = vmatprep.subr.bf16.mxu0 0
  %516 = vmatpush1.bf16.msra.mxu0 %v399
  %517 = vmatprep.subr.bf16.mxu0 0
  %518 = vmatpush1.bf16.msra.mxu0 %v398
  %519 = vmatprep.subr.bf16.mxu0 0
  %520 = vmatpush2.bf16.msra.mxu0 0
  %521 = vmatprep.subr.bf16.mxu0 0
  %522 = vmatpush2.bf16.msra.mxu0 0
  %523 = vmatprep.subr.bf16.mxu0 0
  %524 = vmatpush2.bf16.msra.mxu0 0
  %525 = vmatprep.subr.bf16.mxu0 0
  %526 = vmatpush2.bf16.msra.mxu0 0
  %527 = vmatprep.subr.bf16.mxu0 0
  %528 = vmatpush2.bf16.msra.mxu0 0
  %529 = vmatprep.subr.bf16.mxu0 0
  %530 = vmatpush2.bf16.msra.mxu0 0
  %531 = vmatprep.subr.bf16.mxu0 0
  %532 = vmatpush2.bf16.msra.mxu0 0
  %533 = vmatprep.subr.bf16.mxu0 0
  %534 = vmatpush2.bf16.msra.mxu0 0
  %535 = vmatprep.mubr.bf16.mxu0 0
  %536 = vmatmul.mubr.bf16.gmra.mxu0 %v408
  %v537 = vpop.f32.mrf.mxu0
  %v538 = vadd.f32 0.0, %v537
  %v539 = vpop.f32.mrf.mxu0
  %v540 = vpop.f32.mrf.mxu0
  %v541 = vadd.f32 0.0, %v540
  %v542 = vpop.f32.mrf.mxu0
  %543 = vmatprep.mubr.bf16.mxu0 0
  %544 = vmatmul.mubr.bf16.gmra.mxu0 %v411
  %v545 = vpop.f32.mrf.mxu0
  %v546 = vadd.f32 0.0, %v545
  %v547 = vpop.f32.mrf.mxu0
  %v548 = vpop.f32.mrf.mxu0
  %v549 = vadd.f32 0.0, %v548
  %v550 = vpop.f32.mrf.mxu0
  %551 = vmatprep.mubr.bf16.mxu0 0
  %552 = vmatmul.mubr.bf16.gmra.mxu0 %v414
  %v553 = vpop.f32.mrf.mxu0
  %v554 = vadd.f32 0.0, %v553
  %v555 = vpop.f32.mrf.mxu0
  %v556 = vpop.f32.mrf.mxu0
  %v557 = vadd.f32 0.0, %v556
  %v558 = vpop.f32.mrf.mxu0
  %559 = vmatprep.mubr.bf16.mxu0 0
  %560 = vmatmul.mubr.bf16.gmra.mxu0 %v417
  %v561 = vpop.f32.mrf.mxu0
  %v562 = vadd.f32 0.0, %v561
  %v563 = vpop.f32.mrf.mxu0
  %v564 = vpop.f32.mrf.mxu0
  %v565 = vadd.f32 0.0, %v564
  %v566 = vpop.f32.mrf.mxu0
  %567 = vmatprep.mubr.bf16.mxu0 0
  %568 = vmatmul.mubr.bf16.gmra.mxu0 %v420
  %v569 = vpop.f32.mrf.mxu0
  %v570 = vadd.f32 0.0, %v569
  %v571 = vpop.f32.mrf.mxu0
  %v572 = vpop.f32.mrf.mxu0
  %v573 = vadd.f32 0.0, %v572
  %v574 = vpop.f32.mrf.mxu0
  %575 = vmatprep.mubr.bf16.mxu0 0
  %576 = vmatmul.mubr.bf16.gmra.mxu0 %v423
  %v577 = vpop.f32.mrf.mxu0
  %v578 = vadd.f32 0.0, %v577
  %v579 = vpop.f32.mrf.mxu0
  %v580 = vpop.f32.mrf.mxu0
  %v581 = vadd.f32 0.0, %v580
  %v582 = vpop.f32.mrf.mxu0
  %583 = vmatprep.mubr.bf16.mxu0 0
  %584 = vmatmul.mubr.bf16.gmra.mxu0 %v426
  %v585 = vpop.f32.mrf.mxu0
  %v586 = vadd.f32 0.0, %v585
  %v587 = vpop.f32.mrf.mxu0
  %v588 = vpop.f32.mrf.mxu0
  %v589 = vadd.f32 0.0, %v588
  %v590 = vpop.f32.mrf.mxu0
  %591 = vmatprep.mubr.bf16.mxu0 0
  %592 = vmatmul.mubr.bf16.gmra.mxu0 %v429
  %v593 = vpop.f32.mrf.mxu0
  %v594 = vadd.f32 0.0, %v593
  %v595 = vpop.f32.mrf.mxu0
  %v596 = vpop.f32.mrf.mxu0
  %v597 = vadd.f32 0.0, %v596
  %v598 = vpop.f32.mrf.mxu0
  %599 = vmatprep.mubr.bf16.mxu0 0
  %600 = vmatmul.mubr.bf16.gmra.mxu0 %v432
  %v601 = vpop.f32.mrf.mxu0
  %v602 = vadd.f32 0.0, %v601
  %v603 = vpop.f32.mrf.mxu0
  %v604 = vpop.f32.mrf.mxu0
  %v605 = vadd.f32 0.0, %v604
  %v606 = vpop.f32.mrf.mxu0
  %607 = vmatprep.mubr.bf16.mxu0 0
  %608 = vmatmul.mubr.bf16.gmra.mxu0 %v435
  %v609 = vpop.f32.mrf.mxu0
  %v610 = vadd.f32 0.0, %v609
  %v611 = vpop.f32.mrf.mxu0
  %v612 = vpop.f32.mrf.mxu0
  %v613 = vadd.f32 0.0, %v612
  %v614 = vpop.f32.mrf.mxu0
  %615 = vmatprep.mubr.bf16.mxu0 0
  %616 = vmatmul.mubr.bf16.gmra.mxu0 %v438
  %v617 = vpop.f32.mrf.mxu0
  %v618 = vadd.f32 0.0, %v617
  %v619 = vpop.f32.mrf.mxu0
  %v620 = vpop.f32.mrf.mxu0
  %v621 = vadd.f32 0.0, %v620
  %v622 = vpop.f32.mrf.mxu0
  %623 = vmatprep.mubr.bf16.mxu0 0
  %624 = vmatmul.mubr.bf16.gmra.mxu0 %v441
  %v625 = vpop.f32.mrf.mxu0
  %v626 = vadd.f32 0.0, %v625
  %v627 = vpop.f32.mrf.mxu0
  %v628 = vpop.f32.mrf.mxu0
  %v629 = vadd.f32 0.0, %v628
  %v630 = vpop.f32.mrf.mxu0
  %631 = vmatprep.mubr.bf16.mxu0 0
  %632 = vmatmul.mubr.bf16.gmra.mxu0 %v444
  %v633 = vpop.f32.mrf.mxu0
  %v634 = vadd.f32 0.0, %v633
  %v635 = vpop.f32.mrf.mxu0
  %v636 = vpop.f32.mrf.mxu0
  %v637 = vadd.f32 0.0, %v636
  %v638 = vpop.f32.mrf.mxu0
  %639 = vmatprep.mubr.bf16.mxu0 0
  %640 = vmatmul.mubr.bf16.gmra.mxu0 %v447
  %v641 = vpop.f32.mrf.mxu0
  %v642 = vadd.f32 0.0, %v641
  %v643 = vpop.f32.mrf.mxu0
  %v644 = vpop.f32.mrf.mxu0
  %v645 = vadd.f32 0.0, %v644
  %v646 = vpop.f32.mrf.mxu0
  %647 = vmatprep.mubr.bf16.mxu0 0
  %648 = vmatmul.mubr.bf16.gmra.mxu0 %v450
  %v649 = vpop.f32.mrf.mxu0
  %v650 = vadd.f32 0.0, %v649
  %v651 = vpop.f32.mrf.mxu0
  %v652 = vpop.f32.mrf.mxu0
  %v653 = vadd.f32 0.0, %v652
  %v654 = vpop.f32.mrf.mxu0
  %655 = vmatprep.mubr.bf16.mxu0 0
  %656 = vmatmul.mubr.bf16.gmra.mxu0 %v453
  %v657 = vpop.f32.mrf.mxu0
  %v658 = vadd.f32 0.0, %v657
  %v659 = vpop.f32.mrf.mxu0
  %v660 = vpop.f32.mrf.mxu0
  %v661 = vadd.f32 0.0, %v660
  %v662 = vpop.f32.mrf.mxu0
  %663 = vmatprep.mubr.bf16.mxu0 0
  %664 = vmatmul.mubr.bf16.gmra.mxu0 %v456
  %v665 = vpop.f32.mrf.mxu0
  %v666 = vadd.f32 0.0, %v665
  %v667 = vpop.f32.mrf.mxu0
  %v668 = vpop.f32.mrf.mxu0
  %v669 = vadd.f32 0.0, %v668
  %v670 = vpop.f32.mrf.mxu0
  %671 = vmatprep.mubr.bf16.mxu0 0
  %672 = vmatmul.mubr.bf16.gmra.mxu0 %v459
  %v673 = vpop.f32.mrf.mxu0
  %v674 = vadd.f32 0.0, %v673
  %v675 = vpop.f32.mrf.mxu0
  %v676 = vpop.f32.mrf.mxu0
  %v677 = vadd.f32 0.0, %v676
  %v678 = vpop.f32.mrf.mxu0
  %679 = vmatprep.mubr.bf16.mxu0 0
  %680 = vmatmul.mubr.bf16.gmra.mxu0 %v462
  %v681 = vpop.f32.mrf.mxu0
  %v682 = vadd.f32 0.0, %v681
  %v683 = vpop.f32.mrf.mxu0
  %v684 = vpop.f32.mrf.mxu0
  %v685 = vadd.f32 0.0, %v684
  %v686 = vpop.f32.mrf.mxu0
  %687 = vmatprep.mubr.bf16.mxu0 0
  %688 = vmatmul.mubr.bf16.gmra.mxu0 %v465
  %v689 = vpop.f32.mrf.mxu0
  %v690 = vadd.f32 0.0, %v689
  %v691 = vpop.f32.mrf.mxu0
  %v692 = vpop.f32.mrf.mxu0
  %v693 = vadd.f32 0.0, %v692
  %v694 = vpop.f32.mrf.mxu0
  %695 = vmatprep.mubr.bf16.mxu0 0
  %696 = vmatmul.mubr.bf16.gmra.mxu0 %v468
  %v697 = vpop.f32.mrf.mxu0
  %v698 = vadd.f32 0.0, %v697
  %v699 = vpop.f32.mrf.mxu0
  %v700 = vpop.f32.mrf.mxu0
  %v701 = vadd.f32 0.0, %v700
  %v702 = vpop.f32.mrf.mxu0
  %703 = vmatprep.mubr.bf16.mxu0 0
  %704 = vmatmul.mubr.bf16.gmra.mxu0 %v471
  %v705 = vpop.f32.mrf.mxu0
  %v706 = vadd.f32 0.0, %v705
  %v707 = vpop.f32.mrf.mxu0
  %v708 = vpop.f32.mrf.mxu0
  %v709 = vadd.f32 0.0, %v708
  %v710 = vpop.f32.mrf.mxu0
  %711 = vmatprep.mubr.bf16.mxu0 0
  %712 = vmatmul.mubr.bf16.gmra.mxu0 %v474
  %v713 = vpop.f32.mrf.mxu0
  %v714 = vadd.f32 0.0, %v713
  %v715 = vpop.f32.mrf.mxu0
  %v716 = vpop.f32.mrf.mxu0
  %v717 = vadd.f32 0.0, %v716
  %v718 = vpop.f32.mrf.mxu0
  %719 = vmatprep.mubr.bf16.mxu0 0
  %720 = vmatmul.mubr.bf16.gmra.mxu0 %v477
  %v721 = vpop.f32.mrf.mxu0
  %v722 = vadd.f32 0.0, %v721
  %v723 = vpop.f32.mrf.mxu0
  %v724 = vpop.f32.mrf.mxu0
  %v725 = vadd.f32 0.0, %v724
  %v726 = vpop.f32.mrf.mxu0
  %727 = vmatprep.mubr.bf16.mxu0 0
  %728 = vmatmul.mubr.bf16.gmra.mxu0 %v480
  %v729 = vpop.f32.mrf.mxu0
  %v730 = vadd.f32 0.0, %v729
  %v731 = vpop.f32.mrf.mxu0
  %v732 = vpop.f32.mrf.mxu0
  %v733 = vadd.f32 0.0, %v732
  %v734 = vpop.f32.mrf.mxu0
  %735 = vmatprep.mubr.bf16.mxu0 0
  %736 = vmatmul.mubr.bf16.gmra.mxu0 %v483
  %v737 = vpop.f32.mrf.mxu0
  %v738 = vadd.f32 0.0, %v737
  %v739 = vpop.f32.mrf.mxu0
  %v740 = vpop.f32.mrf.mxu0
  %v741 = vadd.f32 0.0, %v740
  %v742 = vpop.f32.mrf.mxu0
  %743 = vmatprep.mubr.bf16.mxu0 0
  %744 = vmatmul.mubr.bf16.gmra.mxu0 %v486
  %v745 = vpop.f32.mrf.mxu0
  %v746 = vadd.f32 0.0, %v745
  %v747 = vpop.f32.mrf.mxu0
  %v748 = vpop.f32.mrf.mxu0
  %v749 = vadd.f32 0.0, %v748
  %v750 = vpop.f32.mrf.mxu0
  %751 = vmatprep.mubr.bf16.mxu0 0
  %752 = vmatmul.mubr.bf16.gmra.mxu0 %v489
  %v753 = vpop.f32.mrf.mxu0
  %v754 = vadd.f32 0.0, %v753
  %v755 = vpop.f32.mrf.mxu0
  %v756 = vpop.f32.mrf.mxu0
  %v757 = vadd.f32 0.0, %v756
  %v758 = vpop.f32.mrf.mxu0
  %759 = vmatprep.mubr.bf16.mxu0 0
  %760 = vmatmul.mubr.bf16.gmra.mxu0 %v492
  %v761 = vpop.f32.mrf.mxu0
  %v762 = vadd.f32 0.0, %v761
  %v763 = vpop.f32.mrf.mxu0
  %v764 = vpop.f32.mrf.mxu0
  %v765 = vadd.f32 0.0, %v764
  %v766 = vpop.f32.mrf.mxu0
  %767 = vmatprep.mubr.bf16.mxu0 0
  %768 = vmatmul.mubr.bf16.gmra.mxu0 %v495
  %v769 = vpop.f32.mrf.mxu0
  %v770 = vadd.f32 0.0, %v769
  %v771 = vpop.f32.mrf.mxu0
  %v772 = vpop.f32.mrf.mxu0
  %v773 = vadd.f32 0.0, %v772
  %v774 = vpop.f32.mrf.mxu0
  %775 = vmatprep.mubr.bf16.mxu0 0
  %776 = vmatmul.mubr.bf16.gmra.mxu0 %v498
  %v777 = vpop.f32.mrf.mxu0
  %v778 = vadd.f32 0.0, %v777
  %v779 = vpop.f32.mrf.mxu0
  %v780 = vpop.f32.mrf.mxu0
  %v781 = vadd.f32 0.0, %v780
  %v782 = vpop.f32.mrf.mxu0
  %783 = vmatprep.mubr.bf16.mxu0 0
  %784 = vmatmul.mubr.bf16.gmra.mxu0 %v501
  %v785 = vpop.f32.mrf.mxu0
  %v786 = vadd.f32 0.0, %v785
  %v787 = vpop.f32.mrf.mxu0
  %v788 = vpop.f32.mrf.mxu0
  %v789 = vadd.f32 0.0, %v788
  %v790 = vpop.f32.mrf.mxu0
  %791 = vdwg.mxu0
  %v792 = vadd.f32 %v86, %v538
  %v793 = vadd.f32 %v87, %v541
  %v794 = vadd.f32 %v88, %v546
  %v795 = vadd.f32 %v89, %v549
  %v796 = vadd.f32 %v90, %v554
  %v797 = vadd.f32 %v91, %v557
  %v798 = vadd.f32 %v92, %v562
  %v799 = vadd.f32 %v93, %v565
  %v800 = vadd.f32 %v94, %v570
  %v801 = vadd.f32 %v95, %v573
  %v802 = vadd.f32 %v96, %v578
  %v803 = vadd.f32 %v97, %v581
  %v804 = vadd.f32 %v98, %v586
  %v805 = vadd.f32 %v99, %v589
  %v806 = vadd.f32 %v100, %v594
  %v807 = vadd.f32 %v101, %v597
  %v808 = vadd.f32 %v102, %v602
  %v809 = vadd.f32 %v103, %v605
  %v810 = vadd.f32 %v104, %v610
  %v811 = vadd.f32 %v105, %v613
  %v812 = vadd.f32 %v106, %v618
  %v813 = vadd.f32 %v107, %v621
  %v814 = vadd.f32 %v108, %v626
  %v815 = vadd.f32 %v109, %v629
  %v816 = vadd.f32 %v110, %v634
  %v817 = vadd.f32 %v111, %v637
  %v818 = vadd.f32 %v112, %v642
  %v819 = vadd.f32 %v113, %v645
  %v820 = vadd.f32 %v114, %v650
  %v821 = vadd.f32 %v115, %v653
  %v822 = vadd.f32 %v116, %v658
  %v823 = vadd.f32 %v117, %v661
  %v824 = vadd.f32 %v118, %v666
  %v825 = vadd.f32 %v119, %v669
  %v826 = vadd.f32 %v120, %v674
  %v827 = vadd.f32 %v121, %v677
  %v828 = vadd.f32 %v122, %v682
  %v829 = vadd.f32 %v123, %v685
  %v830 = vadd.f32 %v124, %v690
  %v831 = vadd.f32 %v125, %v693
  %v832 = vadd.f32 %v126, %v698
  %v833 = vadd.f32 %v127, %v701
  %v834 = vadd.f32 %v128, %v706
  %v835 = vadd.f32 %v129, %v709
  %v836 = vadd.f32 %v130, %v714
  %v837 = vadd.f32 %v131, %v717
  %v838 = vadd.f32 %v132, %v722
  %v839 = vadd.f32 %v133, %v725
  %v840 = vadd.f32 %v134, %v730
  %v841 = vadd.f32 %v135, %v733
  %v842 = vadd.f32 %v136, %v738
  %v843 = vadd.f32 %v137, %v741
  %v844 = vadd.f32 %v138, %v746
  %v845 = vadd.f32 %v139, %v749
  %v846 = vadd.f32 %v140, %v754
  %v847 = vadd.f32 %v141, %v757
  %v848 = vadd.f32 %v142, %v762
  %v849 = vadd.f32 %v143, %v765
  %v850 = vadd.f32 %v144, %v770
  %v851 = vadd.f32 %v145, %v773
  %v852 = vadd.f32 %v146, %v778
  %v853 = vadd.f32 %v147, %v781
  %v854 = vadd.f32 %v148, %v786
  %v855 = vadd.f32 %v149, %v789
  %856 = vst [vmem:[#allocation2] sm:$0xff] %v792
  %857 = vst [vmem:[#allocation2 + $0x8] sm:$0xff] %v793
  %858 = vst [vmem:[#allocation2 + $0x10] sm:$0xff] %v794
  %859 = vst [vmem:[#allocation2 + $0x18] sm:$0xff] %v795
  %860 = vst [vmem:[#allocation2 + $0x20] sm:$0xff] %v796
  %861 = vst [vmem:[#allocation2 + $0x28] sm:$0xff] %v797
  %862 = vst [vmem:[#allocation2 + $0x30] sm:$0xff] %v798
  %863 = vst [vmem:[#allocation2 + $0x38] sm:$0xff] %v799
  %864 = vst [vmem:[#allocation2 + $0x40] sm:$0xff] %v800
  %865 = vst [vmem:[#allocation2 + $0x48] sm:$0xff] %v801
  %866 = vst [vmem:[#allocation2 + $0x50] sm:$0xff] %v802
  %867 = vst [vmem:[#allocation2 + $0x58] sm:$0xff] %v803
  %868 = vst [vmem:[#allocation2 + $0x60] sm:$0xff] %v804
  %869 = vst [vmem:[#allocation2 + $0x68] sm:$0xff] %v805
  %870 = vst [vmem:[#allocation2 + $0x70] sm:$0xff] %v806
  %871 = vst [vmem:[#allocation2 + $0x78] sm:$0xff] %v807
  %872 = vst [vmem:[#allocation2 + $0x80] sm:$0xff] %v808
  %873 = vst [vmem:[#allocation2 + $0x88] sm:$0xff] %v809
  %874 = vst [vmem:[#allocation2 + $0x90] sm:$0xff] %v810
  %875 = vst [vmem:[#allocation2 + $0x98] sm:$0xff] %v811
  %876 = vst [vmem:[#allocation2 + $0xa0] sm:$0xff] %v812
  %877 = vst [vmem:[#allocation2 + $0xa8] sm:$0xff] %v813
  %878 = vst [vmem:[#allocation2 + $0xb0] sm:$0xff] %v814
  %879 = vst [vmem:[#allocation2 + $0xb8] sm:$0xff] %v815
  %880 = vst [vmem:[#allocation2 + $0xc0] sm:$0xff] %v816
  %881 = vst [vmem:[#allocation2 + $0xc8] sm:$0xff] %v817
  %882 = vst [vmem:[#allocation2 + $0xd0] sm:$0xff] %v818
  %883 = vst [vmem:[#allocation2 + $0xd8] sm:$0xff] %v819
  %884 = vst [vmem:[#allocation2 + $0xe0] sm:$0xff] %v820
  %885 = vst [vmem:[#allocation2 + $0xe8] sm:$0xff] %v821
  %886 = vst [vmem:[#allocation2 + $0xf0] sm:$0xff] %v822
  %887 = vst [vmem:[#allocation2 + $0xf8] sm:$0xff] %v823
  %888 = vst [vmem:[#allocation2 + $0x100] sm:$0xff] %v824
  %889 = vst [vmem:[#allocation2 + $0x108] sm:$0xff] %v825
  %890 = vst [vmem:[#allocation2 + $0x110] sm:$0xff] %v826
  %891 = vst [vmem:[#allocation2 + $0x118] sm:$0xff] %v827
  %892 = vst [vmem:[#allocation2 + $0x120] sm:$0xff] %v828
  %893 = vst [vmem:[#allocation2 + $0x128] sm:$0xff] %v829
  %894 = vst [vmem:[#allocation2 + $0x130] sm:$0xff] %v830
  %895 = vst [vmem:[#allocation2 + $0x138] sm:$0xff] %v831
  %896 = vst [vmem:[#allocation2 + $0x140] sm:$0xff] %v832
  %897 = vst [vmem:[#allocation2 + $0x148] sm:$0xff] %v833
  %898 = vst [vmem:[#allocation2 + $0x150] sm:$0xff] %v834
  %899 = vst [vmem:[#allocation2 + $0x158] sm:$0xff] %v835
  %900 = vst [vmem:[#allocation2 + $0x160] sm:$0xff] %v836
  %901 = vst [vmem:[#allocation2 + $0x168] sm:$0xff] %v837
  %902 = vst [vmem:[#allocation2 + $0x170] sm:$0xff] %v838
  %903 = vst [vmem:[#allocation2 + $0x178] sm:$0xff] %v839
  %904 = vst [vmem:[#allocation2 + $0x180] sm:$0xff] %v840
  %905 = vst [vmem:[#allocation2 + $0x188] sm:$0xff] %v841
  %906 = vst [vmem:[#allocation2 + $0x190] sm:$0xff] %v842
  %907 = vst [vmem:[#allocation2 + $0x198] sm:$0xff] %v843
  %908 = vst [vmem:[#allocation2 + $0x1a0] sm:$0xff] %v844
  %909 = vst [vmem:[#allocation2 + $0x1a8] sm:$0xff] %v845
  %910 = vst [vmem:[#allocation2 + $0x1b0] sm:$0xff] %v846
  %911 = vst [vmem:[#allocation2 + $0x1b8] sm:$0xff] %v847
  %912 = vst [vmem:[#allocation2 + $0x1c0] sm:$0xff] %v848
  %913 = vst [vmem:[#allocation2 + $0x1c8] sm:$0xff] %v849
  %914 = vst [vmem:[#allocation2 + $0x1d0] sm:$0xff] %v850
  %915 = vst [vmem:[#allocation2 + $0x1d8] sm:$0xff] %v851
  %916 = vst [vmem:[#allocation2 + $0x1e0] sm:$0xff] %v852
  %917 = vst [vmem:[#allocation2 + $0x1e8] sm:$0xff] %v853
  %918 = vst [vmem:[#allocation2 + $0x1f0] sm:$0xff] %v854
  %919 = vst [vmem:[#allocation2 + $0x1f8] sm:$0xff] %v855
  // Predicated region
  $region22: #{ck_forward.3} parent=0 // pred_check
    %p920 = pneg %p18
  $region23: #{ck_forward.3} parent=0 // pred_check_branch
    %922 = sbr.rel (%p920) target = $region25
  $region24: #{ck_forward.3} parent=0 // pred_region
    %v923 = vld [vmem:[#allocation2] sm:$0xff]
    %v924 = vld [vmem:[#allocation2 + $0x8] sm:$0xff]
    %v925 = vld [vmem:[#allocation2 + $0x10] sm:$0xff]
    %v926 = vld [vmem:[#allocation2 + $0x18] sm:$0xff]
    %v927 = vld [vmem:[#allocation2 + $0x20] sm:$0xff]
    %v928 = vld [vmem:[#allocation2 + $0x28] sm:$0xff]
    %v929 = vld [vmem:[#allocation2 + $0x30] sm:$0xff]
    %v930 = vld [vmem:[#allocation2 + $0x38] sm:$0xff]
    %v931 = vld [vmem:[#allocation2 + $0x40] sm:$0xff]
    %v932 = vld [vmem:[#allocation2 + $0x48] sm:$0xff]
    %v933 = vld [vmem:[#allocation2 + $0x50] sm:$0xff]
    %v934 = vld [vmem:[#allocation2 + $0x58] sm:$0xff]
    %v935 = vld [vmem:[#allocation2 + $0x60] sm:$0xff]
    %v936 = vld [vmem:[#allocation2 + $0x68] sm:$0xff]
    %v937 = vld [vmem:[#allocation2 + $0x70] sm:$0xff]
    %v938 = vld [vmem:[#allocation2 + $0x78] sm:$0xff]
    %v939 = vld [vmem:[#allocation2 + $0x80] sm:$0xff]
    %v940 = vld [vmem:[#allocation2 + $0x88] sm:$0xff]
    %v941 = vld [vmem:[#allocation2 + $0x90] sm:$0xff]
    %v942 = vld [vmem:[#allocation2 + $0x98] sm:$0xff]
    %v943 = vld [vmem:[#allocation2 + $0xa0] sm:$0xff]
    %v944 = vld [vmem:[#allocation2 + $0xa8] sm:$0xff]
    %v945 = vld [vmem:[#allocation2 + $0xb0] sm:$0xff]
    %v946 = vld [vmem:[#allocation2 + $0xb8] sm:$0xff]
    %v947 = vld [vmem:[#allocation2 + $0xc0] sm:$0xff]
    %v948 = vld [vmem:[#allocation2 + $0xc8] sm:$0xff]
    %v949 = vld [vmem:[#allocation2 + $0xd0] sm:$0xff]
    %v950 = vld [vmem:[#allocation2 + $0xd8] sm:$0xff]
    %v951 = vld [vmem:[#allocation2 + $0xe0] sm:$0xff]
    %v952 = vld [vmem:[#allocation2 + $0xe8] sm:$0xff]
    %v953 = vld [vmem:[#allocation2 + $0xf0] sm:$0xff]
    %v954 = vld [vmem:[#allocation2 + $0xf8] sm:$0xff]
    %v955 = vld [vmem:[#allocation2 + $0x100] sm:$0xff]
    %v956 = vld [vmem:[#allocation2 + $0x108] sm:$0xff]
    %v957 = vld [vmem:[#allocation2 + $0x110] sm:$0xff]
    %v958 = vld [vmem:[#allocation2 + $0x118] sm:$0xff]
    %v959 = vld [vmem:[#allocation2 + $0x120] sm:$0xff]
    %v960 = vld [vmem:[#allocation2 + $0x128] sm:$0xff]
    %v961 = vld [vmem:[#allocation2 + $0x130] sm:$0xff]
    %v962 = vld [vmem:[#allocation2 + $0x138] sm:$0xff]
    %v963 = vld [vmem:[#allocation2 + $0x140] sm:$0xff]
    %v964 = vld [vmem:[#allocation2 + $0x148] sm:$0xff]
    %v965 = vld [vmem:[#allocation2 + $0x150] sm:$0xff]
    %v966 = vld [vmem:[#allocation2 + $0x158] sm:$0xff]
    %v967 = vld [vmem:[#allocation2 + $0x160] sm:$0xff]
    %v968 = vld [vmem:[#allocation2 + $0x168] sm:$0xff]
    %v969 = vld [vmem:[#allocation2 + $0x170] sm:$0xff]
    %v970 = vld [vmem:[#allocation2 + $0x178] sm:$0xff]
    %v971 = vld [vmem:[#allocation2 + $0x180] sm:$0xff]
    %v972 = vld [vmem:[#allocation2 + $0x188] sm:$0xff]
    %v973 = vld [vmem:[#allocation2 + $0x190] sm:$0xff]
    %v974 = vld [vmem:[#allocation2 + $0x198] sm:$0xff]
    %v975 = vld [vmem:[#allocation2 + $0x1a0] sm:$0xff]
    %v976 = vld [vmem:[#allocation2 + $0x1a8] sm:$0xff]
    %v977 = vld [vmem:[#allocation2 + $0x1b0] sm:$0xff]
    %v978 = vld [vmem:[#allocation2 + $0x1b8] sm:$0xff]
    %v979 = vld [vmem:[#allocation2 + $0x1c0] sm:$0xff]
    %v980 = vld [vmem:[#allocation2 + $0x1c8] sm:$0xff]
    %v981 = vld [vmem:[#allocation2 + $0x1d0] sm:$0xff]
    %v982 = vld [vmem:[#allocation2 + $0x1d8] sm:$0xff]
    %v983 = vld [vmem:[#allocation2 + $0x1e0] sm:$0xff]
    %v984 = vld [vmem:[#allocation2 + $0x1e8] sm:$0xff]
    %v985 = vld [vmem:[#allocation2 + $0x1f0] sm:$0xff]
    %v986 = vld [vmem:[#allocation2 + $0x1f8] sm:$0xff]
    %v987 = vld [vmem:[%s2] sm:$0x1]
    %v989 = vlaneseq
    %v990 = vshrl.u32 %v989, 7
    %v991 = vsub.s32 0, %v990
    %v992 = vrot.slane %v987, %v991
    %v994 = vmul.f32 %v923, %v992
    %v995 = vmul.f32 %v924, %v992
    %v996 = vmul.f32 %v925, %v992
    %v997 = vmul.f32 %v926, %v992
    %v998 = vmul.f32 %v927, %v992
    %v999 = vmul.f32 %v928, %v992
    %v1000 = vmul.f32 %v929, %v992
    %v1001 = vmul.f32 %v930, %v992
    %v1002 = vmul.f32 %v931, %v992
    %v1003 = vmul.f32 %v932, %v992
    %v1004 = vmul.f32 %v933, %v992
    %v1005 = vmul.f32 %v934, %v992
    %v1006 = vmul.f32 %v935, %v992
    %v1007 = vmul.f32 %v936, %v992
    %v1008 = vmul.f32 %v937, %v992
    %v1009 = vmul.f32 %v938, %v992
    %v1010 = vmul.f32 %v939, %v992
    %v1011 = vmul.f32 %v940, %v992
    %v1012 = vmul.f32 %v941, %v992
    %v1013 = vmul.f32 %v942, %v992
    %v1014 = vmul.f32 %v943, %v992
    %v1015 = vmul.f32 %v944, %v992
    %v1016 = vmul.f32 %v945, %v992
    %v1017 = vmul.f32 %v946, %v992
    %v1018 = vmul.f32 %v947, %v992
    %v1019 = vmul.f32 %v948, %v992
    %v1020 = vmul.f32 %v949, %v992
    %v1021 = vmul.f32 %v950, %v992
    %v1022 = vmul.f32 %v951, %v992
    %v1023 = vmul.f32 %v952, %v992
    %v1024 = vmul.f32 %v953, %v992
    %v1025 = vmul.f32 %v954, %v992
    %v1026 = vmul.f32 %v955, %v992
    %v1027 = vmul.f32 %v956, %v992
    %v1028 = vmul.f32 %v957, %v992
    %v1029 = vmul.f32 %v958, %v992
    %v1030 = vmul.f32 %v959, %v992
    %v1031 = vmul.f32 %v960, %v992
    %v1032 = vmul.f32 %v961, %v992
    %v1033 = vmul.f32 %v962, %v992
    %v1034 = vmul.f32 %v963, %v992
    %v1035 = vmul.f32 %v964, %v992
    %v1036 = vmul.f32 %v965, %v992
    %v1037 = vmul.f32 %v966, %v992
    %v1038 = vmul.f32 %v967, %v992
    %v1039 = vmul.f32 %v968, %v992
    %v1040 = vmul.f32 %v969, %v992
    %v1041 = vmul.f32 %v970, %v992
    %v1042 = vmul.f32 %v971, %v992
    %v1043 = vmul.f32 %v972, %v992
    %v1044 = vmul.f32 %v973, %v992
    %v1045 = vmul.f32 %v974, %v992
    %v1046 = vmul.f32 %v975, %v992
    %v1047 = vmul.f32 %v976, %v992
    %v1048 = vmul.f32 %v977, %v992
    %v1049 = vmul.f32 %v978, %v992
    %v1050 = vmul.f32 %v979, %v992
    %v1051 = vmul.f32 %v980, %v992
    %v1052 = vmul.f32 %v981, %v992
    %v1053 = vmul.f32 %v982, %v992
    %v1054 = vmul.f32 %v983, %v992
    %v1055 = vmul.f32 %v984, %v992
    %v1056 = vmul.f32 %v985, %v992
    %v1057 = vmul.f32 %v986, %v992
    %v1058 = vld [vmem:[%s3] sm:$0x1]
    %v1060 = vlaneseq
    %v1061 = vshrl.u32 %v1060, 7
    %v1062 = vsub.s32 0, %v1061
    %v1063 = vrot.slane %v1058, %v1062
    %v1065 = vadd.f32 %v994, %v1063
    %v1066 = vadd.f32 %v995, %v1063
    %v1067 = vadd.f32 %v996, %v1063
    %v1068 = vadd.f32 %v997, %v1063
    %v1069 = vadd.f32 %v998, %v1063
    %v1070 = vadd.f32 %v999, %v1063
    %v1071 = vadd.f32 %v1000, %v1063
    %v1072 = vadd.f32 %v1001, %v1063
    %v1073 = vadd.f32 %v1002, %v1063
    %v1074 = vadd.f32 %v1003, %v1063
    %v1075 = vadd.f32 %v1004, %v1063
    %v1076 = vadd.f32 %v1005, %v1063
    %v1077 = vadd.f32 %v1006, %v1063
    %v1078 = vadd.f32 %v1007, %v1063
    %v1079 = vadd.f32 %v1008, %v1063
    %v1080 = vadd.f32 %v1009, %v1063
    %v1081 = vadd.f32 %v1010, %v1063
    %v1082 = vadd.f32 %v1011, %v1063
    %v1083 = vadd.f32 %v1012, %v1063
    %v1084 = vadd.f32 %v1013, %v1063
    %v1085 = vadd.f32 %v1014, %v1063
    %v1086 = vadd.f32 %v1015, %v1063
    %v1087 = vadd.f32 %v1016, %v1063
    %v1088 = vadd.f32 %v1017, %v1063
    %v1089 = vadd.f32 %v1018, %v1063
    %v1090 = vadd.f32 %v1019, %v1063
    %v1091 = vadd.f32 %v1020, %v1063
    %v1092 = vadd.f32 %v1021, %v1063
    %v1093 = vadd.f32 %v1022, %v1063
    %v1094 = vadd.f32 %v1023, %v1063
    %v1095 = vadd.f32 %v1024, %v1063
    %v1096 = vadd.f32 %v1025, %v1063
    %v1097 = vadd.f32 %v1026, %v1063
    %v1098 = vadd.f32 %v1027, %v1063
    %v1099 = vadd.f32 %v1028, %v1063
    %v1100 = vadd.f32 %v1029, %v1063
    %v1101 = vadd.f32 %v1030, %v1063
    %v1102 = vadd.f32 %v1031, %v1063
    %v1103 = vadd.f32 %v1032, %v1063
    %v1104 = vadd.f32 %v1033, %v1063
    %v1105 = vadd.f32 %v1034, %v1063
    %v1106 = vadd.f32 %v1035, %v1063
    %v1107 = vadd.f32 %v1036, %v1063
    %v1108 = vadd.f32 %v1037, %v1063
    %v1109 = vadd.f32 %v1038, %v1063
    %v1110 = vadd.f32 %v1039, %v1063
    %v1111 = vadd.f32 %v1040, %v1063
    %v1112 = vadd.f32 %v1041, %v1063
    %v1113 = vadd.f32 %v1042, %v1063
    %v1114 = vadd.f32 %v1043, %v1063
    %v1115 = vadd.f32 %v1044, %v1063
    %v1116 = vadd.f32 %v1045, %v1063
    %v1117 = vadd.f32 %v1046, %v1063
    %v1118 = vadd.f32 %v1047, %v1063
    %v1119 = vadd.f32 %v1048, %v1063
    %v1120 = vadd.f32 %v1049, %v1063
    %v1121 = vadd.f32 %v1050, %v1063
    %v1122 = vadd.f32 %v1051, %v1063
    %v1123 = vadd.f32 %v1052, %v1063
    %v1124 = vadd.f32 %v1053, %v1063
    %v1125 = vadd.f32 %v1054, %v1063
    %v1126 = vadd.f32 %v1055, %v1063
    %v1127 = vadd.f32 %v1056, %v1063
    %v1128 = vadd.f32 %v1057, %v1063
    %v1129 = vmax.f32 %v1065, 0.0
    %v1130 = vmax.f32 %v1066, 0.0
    %v1131 = vmax.f32 %v1067, 0.0
    %v1132 = vmax.f32 %v1068, 0.0
    %v1133 = vmax.f32 %v1069, 0.0
    %v1134 = vmax.f32 %v1070, 0.0
    %v1135 = vmax.f32 %v1071, 0.0
    %v1136 = vmax.f32 %v1072, 0.0
    %v1137 = vmax.f32 %v1073, 0.0
    %v1138 = vmax.f32 %v1074, 0.0
    %v1139 = vmax.f32 %v1075, 0.0
    %v1140 = vmax.f32 %v1076, 0.0
    %v1141 = vmax.f32 %v1077, 0.0
    %v1142 = vmax.f32 %v1078, 0.0
    %v1143 = vmax.f32 %v1079, 0.0
    %v1144 = vmax.f32 %v1080, 0.0
    %v1145 = vmax.f32 %v1081, 0.0
    %v1146 = vmax.f32 %v1082, 0.0
    %v1147 = vmax.f32 %v1083, 0.0
    %v1148 = vmax.f32 %v1084, 0.0
    %v1149 = vmax.f32 %v1085, 0.0
    %v1150 = vmax.f32 %v1086, 0.0
    %v1151 = vmax.f32 %v1087, 0.0
    %v1152 = vmax.f32 %v1088, 0.0
    %v1153 = vmax.f32 %v1089, 0.0
    %v1154 = vmax.f32 %v1090, 0.0
    %v1155 = vmax.f32 %v1091, 0.0
    %v1156 = vmax.f32 %v1092, 0.0
    %v1157 = vmax.f32 %v1093, 0.0
    %v1158 = vmax.f32 %v1094, 0.0
    %v1159 = vmax.f32 %v1095, 0.0
    %v1160 = vmax.f32 %v1096, 0.0
    %v1161 = vmax.f32 %v1097, 0.0
    %v1162 = vmax.f32 %v1098, 0.0
    %v1163 = vmax.f32 %v1099, 0.0
    %v1164 = vmax.f32 %v1100, 0.0
    %v1165 = vmax.f32 %v1101, 0.0
    %v1166 = vmax.f32 %v1102, 0.0
    %v1167 = vmax.f32 %v1103, 0.0
    %v1168 = vmax.f32 %v1104, 0.0
    %v1169 = vmax.f32 %v1105, 0.0
    %v1170 = vmax.f32 %v1106, 0.0
    %v1171 = vmax.f32 %v1107, 0.0
    %v1172 = vmax.f32 %v1108, 0.0
    %v1173 = vmax.f32 %v1109, 0.0
    %v1174 = vmax.f32 %v1110, 0.0
    %v1175 = vmax.f32 %v1111, 0.0
    %v1176 = vmax.f32 %v1112, 0.0
    %v1177 = vmax.f32 %v1113, 0.0
    %v1178 = vmax.f32 %v1114, 0.0
    %v1179 = vmax.f32 %v1115, 0.0
    %v1180 = vmax.f32 %v1116, 0.0
    %v1181 = vmax.f32 %v1117, 0.0
    %v1182 = vmax.f32 %v1118, 0.0
    %v1183 = vmax.f32 %v1119, 0.0
    %v1184 = vmax.f32 %v1120, 0.0
    %v1185 = vmax.f32 %v1121, 0.0
    %v1186 = vmax.f32 %v1122, 0.0
    %v1187 = vmax.f32 %v1123, 0.0
    %v1188 = vmax.f32 %v1124, 0.0
    %v1189 = vmax.f32 %v1125, 0.0
    %v1190 = vmax.f32 %v1126, 0.0
    %v1191 = vmax.f32 %v1127, 0.0
    %v1192 = vmax.f32 %v1128, 0.0
    %vm1193 = vcmask 64512
    %1194 = vst.msk [vmem:[%s4] sm:$0xff] %vm1193, %v1129
    %1195 = vst.msk [vmem:[%s4 + $0x8] sm:$0xff] %vm1193, %v1130
    %1196 = vst.msk [vmem:[%s4 + $0x10] sm:$0xff] %vm1193, %v1131
    %1197 = vst.msk [vmem:[%s4 + $0x18] sm:$0xff] %vm1193, %v1132
    %1198 = vst.msk [vmem:[%s4 + $0x20] sm:$0xff] %vm1193, %v1133
    %1199 = vst.msk [vmem:[%s4 + $0x28] sm:$0xff] %vm1193, %v1134
    %1200 = vst.msk [vmem:[%s4 + $0x30] sm:$0xff] %vm1193, %v1135
    %1201 = vst.msk [vmem:[%s4 + $0x38] sm:$0xff] %vm1193, %v1136
    %1202 = vst.msk [vmem:[%s4 + $0x40] sm:$0xff] %vm1193, %v1137
    %1203 = vst.msk [vmem:[%s4 + $0x48] sm:$0xff] %vm1193, %v1138
    %1204 = vst.msk [vmem:[%s4 + $0x50] sm:$0xff] %vm1193, %v1139
    %1205 = vst.msk [vmem:[%s4 + $0x58] sm:$0xff] %vm1193, %v1140
    %1206 = vst.msk [vmem:[%s4 + $0x60] sm:$0xff] %vm1193, %v1141
    %1207 = vst.msk [vmem:[%s4 + $0x68] sm:$0xff] %vm1193, %v1142
    %1208 = vst.msk [vmem:[%s4 + $0x70] sm:$0xff] %vm1193, %v1143
    %1209 = vst.msk [vmem:[%s4 + $0x78] sm:$0xff] %vm1193, %v1144
    %1210 = vst.msk [vmem:[%s4 + $0x80] sm:$0xff] %vm1193, %v1145
    %1211 = vst.msk [vmem:[%s4 + $0x88] sm:$0xff] %vm1193, %v1146
    %1212 = vst.msk [vmem:[%s4 + $0x90] sm:$0xff] %vm1193, %v1147
    %1213 = vst.msk [vmem:[%s4 + $0x98] sm:$0xff] %vm1193, %v1148
    %1214 = vst.msk [vmem:[%s4 + $0xa0] sm:$0xff] %vm1193, %v1149
    %1215 = vst.msk [vmem:[%s4 + $0xa8] sm:$0xff] %vm1193, %v1150
    %1216 = vst.msk [vmem:[%s4 + $0xb0] sm:$0xff] %vm1193, %v1151
    %1217 = vst.msk [vmem:[%s4 + $0xb8] sm:$0xff] %vm1193, %v1152
    %1218 = vst.msk [vmem:[%s4 + $0xc0] sm:$0xff] %vm1193, %v1153
    %1219 = vst.msk [vmem:[%s4 + $0xc8] sm:$0xff] %vm1193, %v1154
    %1220 = vst.msk [vmem:[%s4 + $0xd0] sm:$0xff] %vm1193, %v1155
    %1221 = vst.msk [vmem:[%s4 + $0xd8] sm:$0xff] %vm1193, %v1156
    %1222 = vst.msk [vmem:[%s4 + $0xe0] sm:$0xff] %vm1193, %v1157
    %1223 = vst.msk [vmem:[%s4 + $0xe8] sm:$0xff] %vm1193, %v1158
    %1224 = vst.msk [vmem:[%s4 + $0xf0] sm:$0xff] %vm1193, %v1159
    %1225 = vst.msk [vmem:[%s4 + $0xf8] sm:$0xff] %vm1193, %v1160
    %1226 = vst.msk [vmem:[%s4 + $0x100] sm:$0xff] %vm1193, %v1161
    %1227 = vst.msk [vmem:[%s4 + $0x108] sm:$0xff] %vm1193, %v1162
    %1228 = vst.msk [vmem:[%s4 + $0x110] sm:$0xff] %vm1193, %v1163
    %1229 = vst.msk [vmem:[%s4 + $0x118] sm:$0xff] %vm1193, %v1164
    %1230 = vst.msk [vmem:[%s4 + $0x120] sm:$0xff] %vm1193, %v1165
    %1231 = vst.msk [vmem:[%s4 + $0x128] sm:$0xff] %vm1193, %v1166
    %1232 = vst.msk [vmem:[%s4 + $0x130] sm:$0xff] %vm1193, %v1167
    %1233 = vst.msk [vmem:[%s4 + $0x138] sm:$0xff] %vm1193, %v1168
    %1234 = vst.msk [vmem:[%s4 + $0x140] sm:$0xff] %vm1193, %v1169
    %1235 = vst.msk [vmem:[%s4 + $0x148] sm:$0xff] %vm1193, %v1170
    %1236 = vst.msk [vmem:[%s4 + $0x150] sm:$0xff] %vm1193, %v1171
    %1237 = vst.msk [vmem:[%s4 + $0x158] sm:$0xff] %vm1193, %v1172
    %1238 = vst.msk [vmem:[%s4 + $0x160] sm:$0xff] %vm1193, %v1173
    %1239 = vst.msk [vmem:[%s4 + $0x168] sm:$0xff] %vm1193, %v1174
    %1240 = vst.msk [vmem:[%s4 + $0x170] sm:$0xff] %vm1193, %v1175
    %1241 = vst.msk [vmem:[%s4 + $0x178] sm:$0xff] %vm1193, %v1176
    %1242 = vst.msk [vmem:[%s4 + $0x180] sm:$0xff] %vm1193, %v1177
    %1243 = vst.msk [vmem:[%s4 + $0x188] sm:$0xff] %vm1193, %v1178
    %1244 = vst.msk [vmem:[%s4 + $0x190] sm:$0xff] %vm1193, %v1179
    %1245 = vst.msk [vmem:[%s4 + $0x198] sm:$0xff] %vm1193, %v1180
    %1246 = vst.msk [vmem:[%s4 + $0x1a0] sm:$0xff] %vm1193, %v1181
    %1247 = vst.msk [vmem:[%s4 + $0x1a8] sm:$0xff] %vm1193, %v1182
    %1248 = vst.msk [vmem:[%s4 + $0x1b0] sm:$0xff] %vm1193, %v1183
    %1249 = vst.msk [vmem:[%s4 + $0x1b8] sm:$0xff] %vm1193, %v1184
    %1250 = vst.msk [vmem:[%s4 + $0x1c0] sm:$0xff] %vm1193, %v1185
    %1251 = vst.msk [vmem:[%s4 + $0x1c8] sm:$0xff] %vm1193, %v1186
    %1252 = vst.msk [vmem:[%s4 + $0x1d0] sm:$0xff] %vm1193, %v1187
    %1253 = vst.msk [vmem:[%s4 + $0x1d8] sm:$0xff] %vm1193, %v1188
    %1254 = vst.msk [vmem:[%s4 + $0x1e0] sm:$0xff] %vm1193, %v1189
    %1255 = vst.msk [vmem:[%s4 + $0x1e8] sm:$0xff] %vm1193, %v1190
    %1256 = vst.msk [vmem:[%s4 + $0x1f0] sm:$0xff] %vm1193, %v1191
    %1257 = vst.msk [vmem:[%s4 + $0x1f8] sm:$0xff] %vm1193, %v1192
  $region25: #{ck_forward.3} parent=0 // pred_fallthru
    _
  // Predicated region
  $region26: #{ck_forward.3} parent=0 // pred_check
    _
  $region27: #{ck_forward.3} parent=0 // pred_check_branch
    %1259 = sbr.rel (0) target = $region29
  $region28: #{ck_forward.3} parent=0 // pred_region
    _
  $region29: #{ck_forward.3} parent=0 // pred_fallthru
    _
  // Predicated region
  $region30: #{ck_forward.3} parent=0 // pred_check
    _
  $region31: #{ck_forward.3} parent=0 // pred_check_branch
    %1261 = sbr.rel (0) target = $region33
  $region32: #{ck_forward.3} parent=0 // pred_region
    _
  $region33: #{ck_forward.3} parent=0 // pred_fallthru
    _

</llo_original>
